<compile_context>
chip_gen: v6e
topology: v6e:2x2x1
jax: 0.10.0
libtpu: 0.0.40
codegen_flags: <defaults>
</compile_context>

<pallas_src>
import functools

import jax
import jax.numpy as jnp
from jax.experimental import pallas as pl
from jax.experimental.pallas import tpu as pltpu

_LANES = 128


def _conv2d_kernel(x_ref, w_ref, b_ref, o_ref, strip_ref, *, k, TH, Wo, C):
    # x_ref:     (Hp, Wp, C)        spatially padded NHWC image (one batch elem)
    # w_ref:     (k*k*C, O_pad)     conv weight, (kh, kw, C) folded into K
    # b_ref:     (1, O_pad)         bias (zero-padded), f32
    # o_ref:     (TH*Wo, O_pad)     flat lane-dense output row tile, f32
    # strip_ref: (TH, Wo, k*k*C)    im2col strip scratch (VMEM)
    row0 = pl.multiple_of(pl.program_id(1) * TH, TH)   # first output row of tile

    # Fused im2col: gather the k*k shifted in-VMEM slices into one strip so the
    # MXU sees a single matmul with K = k*k*C instead of k*k matmuls with K=C.
    for kh in range(k):
        for kw in range(k):
            t = kh * k + kw
            strip_ref[:, :, t * C:(t + 1) * C] = (
                x_ref[pl.ds(row0 + kh, TH), kw:kw + Wo, :])

    lhs = strip_ref[...].reshape(TH * Wo, k * k * C)
    acc = jnp.dot(lhs, w_ref[...], preferred_element_type=jnp.float32)
    o_ref[...] = (acc + b_ref[...]).astype(o_ref.dtype)


def _pick_row_tile(Ho: int, Wo: int, max_rows: int = 512) -> int:
    """Largest divisor TH of Ho with TH*Wo <= max_rows and TH*Wo % 8 == 0 so the
    flat (TH*Wo, O_pad) output block satisfies the (8, 128) tiling rule."""
    for th in range(Ho, 0, -1):
        if Ho % th == 0 and th * Wo <= max_rows and (th * Wo) % 8 == 0:
            return th
    return Ho  # full image per step: block == full array dim, always legal.


def simple_conv2d(x, weight, bias=None, padding: int = 0, compute_dtype=None):
    """Forward of nn.Conv2d(C, O, k, padding=padding, bias=...).

    x:      (N, C, H, W) float32
    weight: (O, C, k, k) float32
    bias:   (O,) float32 or None
    compute_dtype: optional MXU operand dtype (e.g. jnp.bfloat16 on v6e/v7x);
                   accumulation stays f32.
    returns (N, O, Ho, Wo), dtype of x
    """
    N, C, H, W = x.shape
    O, C2, k, k2 = weight.shape
    assert C == C2 and k == k2, "weight shape must be (O, C, k, k)"
    # Semantics implemented: stride=1, dilation=1, groups=1 (as in SimpleConv2d).
    Ho = H + 2 * padding - k + 1
    Wo = W + 2 * padding - k + 1
    Hp = H + 2 * padding
    Wp = W + 2 * padding

    O_pad = ((O + _LANES - 1) // _LANES) * _LANES   # lane-dense output channels
    op_dtype = compute_dtype if compute_dtype is not None else x.dtype

    # ---- cheap layout glue (no k*k expansion of the input in HBM) ----
    x_nhwc = jnp.transpose(x, (0, 2, 3, 1))                       # (N, H, W, C)
    x_pad = jnp.pad(x_nhwc, ((0, 0), (padding, padding),
                             (padding, padding), (0, 0))).astype(op_dtype)
    w_hwio = jnp.transpose(weight, (2, 3, 1, 0))                  # (k, k, C, O)
    w_flat = jnp.pad(w_hwio, ((0, 0), (0, 0), (0, 0), (0, O_pad - O)))
    w_flat = w_flat.reshape(k * k * C, O_pad).astype(op_dtype)    # K folded
    if bias is None:
        b_pad = jnp.zeros((1, O_pad), jnp.float32)
    else:
        b_pad = jnp.pad(bias.reshape(1, O).astype(jnp.float32),
                        ((0, 0), (0, O_pad - O)))

    TH = _pick_row_tile(Ho, Wo)
    grid = (N, Ho // TH)

    op_size = jnp.dtype(op_dtype).itemsize
    cost = pl.CostEstimate(
        flops=2 * N * Ho * Wo * C * k * k * O,      # true O (not O_pad)
        transcendentals=0,
        bytes_accessed=(op_size * (N * Hp * Wp * C + k * k * C * O_pad)
                        + 4 * (O_pad + N * Ho * Wo * O_pad)),
    )

    # Double-buffered x / w / b / out tiles + im2col strip scratch, with margin.
    vmem_need = (2 * op_size * Hp * Wp * C
                 + 2 * op_size * k * k * C * O_pad
                 + 2 * 4 * O_pad
                 + 2 * 4 * TH * Wo * O_pad
                 + op_size * TH * Wo * k * k * C)
    vmem_limit = int(min(64 * 2**20, max(32 * 2**20, 2 * vmem_need)))

    kernel = functools.partial(_conv2d_kernel, k=k, TH=TH, Wo=Wo, C=C)

    out_flat = pl.pallas_call(
        kernel,
        out_shape=jax.ShapeDtypeStruct((N, Ho * Wo, O_pad), jnp.float32),
        grid=grid,
        in_specs=[
            # Padded image of this batch element; resident across the row axis.
            pl.BlockSpec((None, Hp, Wp, C), lambda n, h: (n, 0, 0, 0)),
            # Folded weight / bias resident across the entire grid.
            pl.BlockSpec((k * k * C, O_pad), lambda n, h: (0, 0)),
            pl.BlockSpec((1, O_pad), lambda n, h: (0, 0)),
        ],
        out_specs=pl.BlockSpec((None, TH * Wo, O_pad), lambda n, h: (n, h, 0)),
        scratch_shapes=[pltpu.VMEM((TH, Wo, k * k * C), op_dtype)],
        compiler_params=pltpu.CompilerParams(
            dimension_semantics=("parallel", "parallel"),
            vmem_limit_bytes=vmem_limit),
        cost_estimate=cost,
    )(x_pad, w_flat, b_pad)

    # Single fused boundary op: split rows, drop lane padding, NHWC -> NCHW.
    out = out_flat.reshape(N, Ho, Wo, O_pad)[..., :O]
    return jnp.transpose(out, (0, 3, 1, 2)).astype(x.dtype)


if __name__ == "__main__":
    # Small shapes consistent with the module: batch=2, in_channels=4,
    # spatial=16x16, out_channels=8, kernel_size=3, padding=1.
    N, C, H, W = 2, 4, 16, 16
    O, k, padding = 8, 3, 1

    key = jax.random.PRNGKey(0)
    k_x, k_w, k_b = jax.random.split(key, 3)

    x = jax.random.normal(k_x, (N, C, H, W), dtype=jnp.float32)
    # Deterministic parameter init (nn.Conv2d-style uniform bound).
    fan_in = C * k * k
    bound = 1.0 / (fan_in ** 0.5)
    weight = jax.random.uniform(k_w, (O, C, k, k), minval=-bound, maxval=bound,
                                dtype=jnp.float32)
    bias = jax.random.uniform(k_b, (O,), minval=-bound, maxval=bound,
                              dtype=jnp.float32)

    out = simple_conv2d(x, weight, bias, padding=padding)
    out = jax.block_until_ready(out)

    # Reference check against XLA's conv (same semantics as torch Conv2d fwd).
    ref = jax.lax.conv_general_dilated(
        x, weight, window_strides=(1, 1),
        padding=((padding, padding), (padding, padding)),
        dimension_numbers=("NCHW", "OIHW", "NCHW"),
    ) + bias.reshape(1, O, 1, 1)
    assert out.shape == ref.shape == (N, O, H, W)
    assert jnp.allclose(out, ref, atol=1e-4, rtol=1e-4)

    print("KERNEL_OK")
</pallas_src>

<mosaic_0001>
module attributes {stable_mosaic.version = 11 : i64} {
  func.func @_conv2d_kernel(%arg0: i32, %arg1: i32, %arg2: memref<1x18x18x4xf32, #tpu.memory_space<vmem>>, %arg3: memref<36x128xf32, #tpu.memory_space<vmem>>, %arg4: memref<1x128xf32, #tpu.memory_space<vmem>>, %arg5: memref<1x256x128xf32, #tpu.memory_space<vmem>>, %arg6: memref<16x16x36xf32, #tpu.memory_space<vmem>>) attributes {dimension_semantics = [#tpu.dimension_semantics<parallel>, #tpu.dimension_semantics<parallel>], iteration_bounds = array<i64: 2, 1>, scalar_prefetch = 0 : i64, scratch_operands = 1 : i64, tpu.core_type = #tpu.core_type<tc>, window_params = [{transform_indices = @transform_0, window_bounds = array<i64: 1, 18, 18, 4>}, {pipeline_mode = #tpu.pipeline_mode<synchronous>, transform_indices = @transform_1, window_bounds = array<i64: 36, 128>}, {pipeline_mode = #tpu.pipeline_mode<synchronous>, transform_indices = @transform_2, window_bounds = array<i64: 1, 128>}, {transform_indices = @transform_3, window_bounds = array<i64: 1, 256, 128>}]} {
    %c16_i32 = arith.constant 16 : i32
    %0 = arith.muli %arg1, %c16_i32 : i32
    %1 = tpu.assume_multiple %0, 16 : i32
    %c0_i32 = arith.constant 0 : i32
    %2 = arith.addi %1, %c0_i32 : i32
    %c0 = arith.constant 0 : index
    %3 = arith.index_cast %2 : i32 to index
    %c0_0 = arith.constant 0 : index
    %c0_1 = arith.constant 0 : index
    %4 = vector.load %arg2[%c0, %3, %c0_0, %c0_1] : memref<1x18x18x4xf32, #tpu.memory_space<vmem>>, vector<1x16x16x4xf32>
    %5 = vector.shape_cast %4 : vector<1x16x16x4xf32> to vector<16x16x4xf32>
    %c0_2 = arith.constant 0 : index
    %c0_3 = arith.constant 0 : index
    %c0_4 = arith.constant 0 : index
    %6 = vector.load %arg6[%c0_2, %c0_3, %c0_4] : memref<16x16x36xf32, #tpu.memory_space<vmem>>, vector<16x16x4xf32>
    tpu.vector_store %arg6[%c0_2, %c0_3, %c0_4], %5 {strides = array<i32>} : memref<16x16x36xf32, #tpu.memory_space<vmem>>, vector<16x16x4xf32>,
    %c0_i32_5 = arith.constant 0 : i32
    %7 = arith.addi %1, %c0_i32_5 : i32
    %c0_6 = arith.constant 0 : index
    %8 = arith.index_cast %7 : i32 to index
    %c1 = arith.constant 1 : index
    %c0_7 = arith.constant 0 : index
    %9 = vector.load %arg2[%c0_6, %8, %c1, %c0_7] : memref<1x18x18x4xf32, #tpu.memory_space<vmem>>, vector<1x16x16x4xf32>
    %10 = vector.shape_cast %9 : vector<1x16x16x4xf32> to vector<16x16x4xf32>
    %c0_8 = arith.constant 0 : index
    %c0_9 = arith.constant 0 : index
    %c4 = arith.constant 4 : index
    %11 = vector.load %arg6[%c0_8, %c0_9, %c4] : memref<16x16x36xf32, #tpu.memory_space<vmem>>, vector<16x16x4xf32>
    tpu.vector_store %arg6[%c0_8, %c0_9, %c4], %10 {strides = array<i32>} : memref<16x16x36xf32, #tpu.memory_space<vmem>>, vector<16x16x4xf32>,
    %c0_i32_10 = arith.constant 0 : i32
    %12 = arith.addi %1, %c0_i32_10 : i32
    %c0_11 = arith.constant 0 : index
    %13 = arith.index_cast %12 : i32 to index
    %c2 = arith.constant 2 : index
    %c0_12 = arith.constant 0 : index
    %14 = vector.load %arg2[%c0_11, %13, %c2, %c0_12] : memref<1x18x18x4xf32, #tpu.memory_space<vmem>>, vector<1x16x16x4xf32>
    %15 = vector.shape_cast %14 : vector<1x16x16x4xf32> to vector<16x16x4xf32>
    %c0_13 = arith.constant 0 : index
    %c0_14 = arith.constant 0 : index
    %c8 = arith.constant 8 : index
    %16 = vector.load %arg6[%c0_13, %c0_14, %c8] : memref<16x16x36xf32, #tpu.memory_space<vmem>>, vector<16x16x4xf32>
    tpu.vector_store %arg6[%c0_13, %c0_14, %c8], %15 {strides = array<i32>} : memref<16x16x36xf32, #tpu.memory_space<vmem>>, vector<16x16x4xf32>,
    %c1_i32 = arith.constant 1 : i32
    %17 = arith.addi %1, %c1_i32 : i32
    %c0_15 = arith.constant 0 : index
    %18 = arith.index_cast %17 : i32 to index
    %c0_16 = arith.constant 0 : index
    %c0_17 = arith.constant 0 : index
    %19 = vector.load %arg2[%c0_15, %18, %c0_16, %c0_17] : memref<1x18x18x4xf32, #tpu.memory_space<vmem>>, vector<1x16x16x4xf32>
    %20 = vector.shape_cast %19 : vector<1x16x16x4xf32> to vector<16x16x4xf32>
    %c0_18 = arith.constant 0 : index
    %c0_19 = arith.constant 0 : index
    %c12 = arith.constant 12 : index
    %21 = vector.load %arg6[%c0_18, %c0_19, %c12] : memref<16x16x36xf32, #tpu.memory_space<vmem>>, vector<16x16x4xf32>
    tpu.vector_store %arg6[%c0_18, %c0_19, %c12], %20 {strides = array<i32>} : memref<16x16x36xf32, #tpu.memory_space<vmem>>, vector<16x16x4xf32>,
    %c1_i32_20 = arith.constant 1 : i32
    %22 = arith.addi %1, %c1_i32_20 : i32
    %c0_21 = arith.constant 0 : index
    %23 = arith.index_cast %22 : i32 to index
    %c1_22 = arith.constant 1 : index
    %c0_23 = arith.constant 0 : index
    %24 = vector.load %arg2[%c0_21, %23, %c1_22, %c0_23] : memref<1x18x18x4xf32, #tpu.memory_space<vmem>>, vector<1x16x16x4xf32>
    %25 = vector.shape_cast %24 : vector<1x16x16x4xf32> to vector<16x16x4xf32>
    %c0_24 = arith.constant 0 : index
    %c0_25 = arith.constant 0 : index
    %c16 = arith.constant 16 : index
    %26 = vector.load %arg6[%c0_24, %c0_25, %c16] : memref<16x16x36xf32, #tpu.memory_space<vmem>>, vector<16x16x4xf32>
    tpu.vector_store %arg6[%c0_24, %c0_25, %c16], %25 {strides = array<i32>} : memref<16x16x36xf32, #tpu.memory_space<vmem>>, vector<16x16x4xf32>,
    %c1_i32_26 = arith.constant 1 : i32
    %27 = arith.addi %1, %c1_i32_26 : i32
    %c0_27 = arith.constant 0 : index
    %28 = arith.index_cast %27 : i32 to index
    %c2_28 = arith.constant 2 : index
    %c0_29 = arith.constant 0 : index
    %29 = vector.load %arg2[%c0_27, %28, %c2_28, %c0_29] : memref<1x18x18x4xf32, #tpu.memory_space<vmem>>, vector<1x16x16x4xf32>
    %30 = vector.shape_cast %29 : vector<1x16x16x4xf32> to vector<16x16x4xf32>
    %c0_30 = arith.constant 0 : index
    %c0_31 = arith.constant 0 : index
    %c20 = arith.constant 20 : index
    %31 = vector.load %arg6[%c0_30, %c0_31, %c20] : memref<16x16x36xf32, #tpu.memory_space<vmem>>, vector<16x16x4xf32>
    tpu.vector_store %arg6[%c0_30, %c0_31, %c20], %30 {strides = array<i32>} : memref<16x16x36xf32, #tpu.memory_space<vmem>>, vector<16x16x4xf32>,
    %c2_i32 = arith.constant 2 : i32
    %32 = arith.addi %1, %c2_i32 : i32
    %c0_32 = arith.constant 0 : index
    %33 = arith.index_cast %32 : i32 to index
    %c0_33 = arith.constant 0 : index
    %c0_34 = arith.constant 0 : index
    %34 = vector.load %arg2[%c0_32, %33, %c0_33, %c0_34] : memref<1x18x18x4xf32, #tpu.memory_space<vmem>>, vector<1x16x16x4xf32>
    %35 = vector.shape_cast %34 : vector<1x16x16x4xf32> to vector<16x16x4xf32>
    %c0_35 = arith.constant 0 : index
    %c0_36 = arith.constant 0 : index
    %c24 = arith.constant 24 : index
    %36 = vector.load %arg6[%c0_35, %c0_36, %c24] : memref<16x16x36xf32, #tpu.memory_space<vmem>>, vector<16x16x4xf32>
    tpu.vector_store %arg6[%c0_35, %c0_36, %c24], %35 {strides = array<i32>} : memref<16x16x36xf32, #tpu.memory_space<vmem>>, vector<16x16x4xf32>,
    %c2_i32_37 = arith.constant 2 : i32
    %37 = arith.addi %1, %c2_i32_37 : i32
    %c0_38 = arith.constant 0 : index
    %38 = arith.index_cast %37 : i32 to index
    %c1_39 = arith.constant 1 : index
    %c0_40 = arith.constant 0 : index
    %39 = vector.load %arg2[%c0_38, %38, %c1_39, %c0_40] : memref<1x18x18x4xf32, #tpu.memory_space<vmem>>, vector<1x16x16x4xf32>
    %40 = vector.shape_cast %39 : vector<1x16x16x4xf32> to vector<16x16x4xf32>
    %c0_41 = arith.constant 0 : index
    %c0_42 = arith.constant 0 : index
    %c28 = arith.constant 28 : index
    %41 = vector.load %arg6[%c0_41, %c0_42, %c28] : memref<16x16x36xf32, #tpu.memory_space<vmem>>, vector<16x16x4xf32>
    tpu.vector_store %arg6[%c0_41, %c0_42, %c28], %40 {strides = array<i32>} : memref<16x16x36xf32, #tpu.memory_space<vmem>>, vector<16x16x4xf32>,
    %c2_i32_43 = arith.constant 2 : i32
    %42 = arith.addi %1, %c2_i32_43 : i32
    %c0_44 = arith.constant 0 : index
    %43 = arith.index_cast %42 : i32 to index
    %c2_45 = arith.constant 2 : index
    %c0_46 = arith.constant 0 : index
    %44 = vector.load %arg2[%c0_44, %43, %c2_45, %c0_46] : memref<1x18x18x4xf32, #tpu.memory_space<vmem>>, vector<1x16x16x4xf32>
    %45 = vector.shape_cast %44 : vector<1x16x16x4xf32> to vector<16x16x4xf32>
    %c0_47 = arith.constant 0 : index
    %c0_48 = arith.constant 0 : index
    %c32 = arith.constant 32 : index
    %46 = vector.load %arg6[%c0_47, %c0_48, %c32] : memref<16x16x36xf32, #tpu.memory_space<vmem>>, vector<16x16x4xf32>
    tpu.vector_store %arg6[%c0_47, %c0_48, %c32], %45 {strides = array<i32>} : memref<16x16x36xf32, #tpu.memory_space<vmem>>, vector<16x16x4xf32>,
    %c0_49 = arith.constant 0 : index
    %c0_50 = arith.constant 0 : index
    %c0_51 = arith.constant 0 : index
    %47 = vector.load %arg6[%c0_49, %c0_50, %c0_51] : memref<16x16x36xf32, #tpu.memory_space<vmem>>, vector<16x16x36xf32>
    %48 = vector.shape_cast %47 : vector<16x16x36xf32> to vector<256x36xf32>
    %c0_52 = arith.constant 0 : index
    %c0_53 = arith.constant 0 : index
    %49 = vector.load %arg3[%c0_52, %c0_53] : memref<36x128xf32, #tpu.memory_space<vmem>>, vector<36x128xf32>
    %cst = arith.constant dense<0.000000e+00> : vector<256x128xf32>
    %50 = tpu.matmul %48, %49, %cst {dimension_numbers = #tpu.dot_dimension_numbers<[1], [0], [0], [1], [0, 0, 1, 1], [], []>} : vector<256x36xf32>, vector<36x128xf32>, vector<256x128xf32> -> vector<256x128xf32>
    %c0_54 = arith.constant 0 : index
    %c0_55 = arith.constant 0 : index
    %51 = vector.load %arg4[%c0_54, %c0_55] : memref<1x128xf32, #tpu.memory_space<vmem>>, vector<1x128xf32>
    %52 = vector.broadcast %51 : vector<1x128xf32> to vector<256x128xf32>
    %53 = arith.addf %50, %52 : vector<256x128xf32>
    %c0_56 = arith.constant 0 : index
    %c0_57 = arith.constant 0 : index
    %c0_58 = arith.constant 0 : index
    %54 = vector.load %arg5[%c0_56, %c0_57, %c0_58] : memref<1x256x128xf32, #tpu.memory_space<vmem>>, vector<1x256x128xf32>
    %55 = vector.shape_cast %54 : vector<1x256x128xf32> to vector<256x128xf32>
    %56 = vector.shape_cast %53 : vector<256x128xf32> to vector<1x256x128xf32>
    tpu.vector_store %arg5[%c0_56, %c0_57, %c0_58], %56 {strides = array<i32>} : memref<1x256x128xf32, #tpu.memory_space<vmem>>, vector<1x256x128xf32>,
    return
  }
  func.func @transform_0(%arg0: i32, %arg1: i32) -> (i32, i32, i32, i32) {
    %c0_i32 = arith.constant 0 : i32
    %c0_i32_0 = arith.constant 0 : i32
    %c0_i32_1 = arith.constant 0 : i32
    %c0_i32_2 = arith.constant 0 : i32
    return %arg0, %c0_i32, %c0_i32_0, %c0_i32_1 : i32, i32, i32, i32
  }
  func.func @transform_1(%arg0: i32, %arg1: i32) -> (i32, i32) {
    %c0_i32 = arith.constant 0 : i32
    %c0_i32_0 = arith.constant 0 : i32
    %c0_i32_1 = arith.constant 0 : i32
    return %c0_i32, %c0_i32_0 : i32, i32
  }
  func.func @transform_2(%arg0: i32, %arg1: i32) -> (i32, i32) {
    %c0_i32 = arith.constant 0 : i32
    %c0_i32_0 = arith.constant 0 : i32
    %c0_i32_1 = arith.constant 0 : i32
    return %c0_i32, %c0_i32_0 : i32, i32
  }
  func.func @transform_3(%arg0: i32, %arg1: i32) -> (i32, i32, i32) {
    %c0_i32 = arith.constant 0 : i32
    %c0_i32_0 = arith.constant 0 : i32
    return %arg0, %arg1, %c0_i32 : i32, i32, i32
  }
}

</mosaic_0001>

<llo_original>
// kernel: tpu_custom_call.1
$region0: #{tpu_custom_call.1}
  #allocation0 [shape = 'u32[]', space=smem, size = 0x4, offset = 0x4, fixed_abs, tag = 'smem constant byte address 0x4 - core index']
  #allocation1 [shape = 'u32[144,128]{1,0:T(1,128)}', space=vmem, size = 0x12000, scoped, tag = 'internal scratch']
  #allocation2 [shape = 'f32[16,16,36]{2,1,0:T(8,128)}', space=vmem, size = 0x20000, scoped, tag = 'scratch operand']
  %s0 = inlined_call_operand.vmem [shape: f32[2,18,18,4], index: 0, kind: input, shape index: {}]
  %s1 = inlined_call_operand.vmem [shape: f32[36,128], index: 1, kind: input, shape index: {}]
  %s2 = inlined_call_operand.vmem [shape: f32[1,128], index: 2, kind: input, shape index: {}]
  %s3 = inlined_call_operand.hbm [shape: f32[2,256,128], index: 3, kind: output, shape index: {}]
  %s4 = sld [smem:[#allocation0]]
  $region45: #{tpu_custom_call.1} parent=0
    _
  %s6 = ssub.s32 1, %s4
  %s7 = scalar_select 0, %s6, %s4
  $region1: #{tpu_custom_call.1} parent=0
    #allocation3 [shape = 'u8[262144]{0}', space=vmem, size = 0x40000, scoped, tag = 'output window, operand 0']
    #allocation4 [shape = 's32[2]{0}', space=sflag, size = 0x8, scoped, tag = 'scoped memory for tpu_custom_call.1']
    %8 = vsyncpa [#allocation4], 0
    %s9 = scalar_lea.sflag [#allocation4], 1
    %10 = vsyncpa %s9, 0
    loop: start=0, step=1, limit=4
    $region2: #{tpu_custom_call.1} parent=1 // loop_pre_header
      _
    $region3: #{tpu_custom_call.1} parent=1 // loop_header
      %s12 = sphi 0, %s16
      %p13 = scmp.ge.s32.totalorder %s12, 4
      %s19 = sphi 0, %s31
      %s20 = sphi 0, %s27
      %s21 = sphi 0, %s19
      %s22 = sphi 0, %s20
      %s23 = sphi 0, %s21
      %s24 = sphi 0, %s22
      %s34 = sphi 0, %s36
      %s37 = sphi 0, %s34
      %s38 = sphi 0, %s37
      %s54 = sphi 0, %s38
      %s58 = sphi 0, %s58
      %s60 = sphi 0, %s58
      %s61 = sphi 0, %s60
      %s75 = sphi 0, %s61
      %s79 = sphi 0, %s79
      %s81 = sphi 0, %s79
      %s82 = sphi 0, %s81
      %s96 = sphi 0, %s82
      %s104 = sphi 0, %s106
      %s107 = sphi 0, %s104
      %s108 = sphi 0, %s107
      %s124 = sphi 0, %s108
    $region4: #{tpu_custom_call.1} parent=1 // loop_header_branch
      %15 = sbr.rel (%p13) target = $region8
    $region5: #{tpu_custom_call.1} parent=1 // loop_body
      %s17 = ssub.s32 %s12, 1
      %s18 = ssub.s32 %s12, 2
      %s25 = sadd.s32 1, %s20
      %p26 = scmp.ge.s32.totalorder %s25, 1
      %s27 = scalar_select %p26, 0, %s25
      %s28 = sadd.s32 1, %s19
      %s29 = scalar_select %p26, %s28, %s19
      %p30 = scmp.ge.s32.totalorder %s29, 2
      %s31 = scalar_select %p30, 0, %s29
      %s32 = ssub.s32 %s19, %s31
      %p33 = scmp.eq.s32.totalorder %s32, 0
      %s35 = sadd.s32 %s34, 1
      %s36 = scalar_select %p33, %s34, %s35
      %p39 = pneg %p33
      %p40 = scmp.eq.s32.totalorder %s12, 1
      %p41 = por %p39, %p40
      %p42 = scmp.ne.s32.totalorder %s34, %s37
      %p43 = scmp.eq.s32.totalorder %s12, 0
      %p44 = por %p42, %p43
      %p45 = scmp.ne.s32.totalorder %s34, %s37
      %p46 = scmp.eq.s32.totalorder %s17, 1
      %p47 = por %p45, %p46
      %p48 = scmp.ne.s32.totalorder %s37, %s38
      %p49 = scmp.eq.s32.totalorder %s17, 0
      %p50 = por %p48, %p49
      %p51 = scmp.ne.s32.totalorder %s37, %s38
      %p52 = scmp.eq.s32.totalorder %s18, 1
      %p53 = por %p51, %p52
      %p55 = scmp.ne.s32.totalorder %s38, %s54
      %p56 = scmp.eq.s32.totalorder %s18, 0
      %p57 = por %p55, %p56
      %s59 = sadd.s32 %s58, 1
      %p62 = scmp.eq.s32.totalorder %s12, 1
      %p63 = scmp.ne.s32.totalorder %s58, %s60
      %p64 = scmp.eq.s32.totalorder %s12, 0
      %p65 = por %p63, %p64
      %p66 = scmp.ne.s32.totalorder %s58, %s60
      %p67 = scmp.eq.s32.totalorder %s17, 1
      %p68 = por %p66, %p67
      %p69 = scmp.ne.s32.totalorder %s60, %s61
      %p70 = scmp.eq.s32.totalorder %s17, 0
      %p71 = por %p69, %p70
      %p72 = scmp.ne.s32.totalorder %s60, %s61
      %p73 = scmp.eq.s32.totalorder %s18, 1
      %p74 = por %p72, %p73
      %p76 = scmp.ne.s32.totalorder %s61, %s75
      %p77 = scmp.eq.s32.totalorder %s18, 0
      %p78 = por %p76, %p77
      %s80 = sadd.s32 %s79, 1
      %p83 = scmp.eq.s32.totalorder %s12, 1
      %p84 = scmp.ne.s32.totalorder %s79, %s81
      %p85 = scmp.eq.s32.totalorder %s12, 0
      %p86 = por %p84, %p85
      %p87 = scmp.ne.s32.totalorder %s79, %s81
      %p88 = scmp.eq.s32.totalorder %s17, 1
      %p89 = por %p87, %p88
      %p90 = scmp.ne.s32.totalorder %s81, %s82
      %p91 = scmp.eq.s32.totalorder %s17, 0
      %p92 = por %p90, %p91
      %p93 = scmp.ne.s32.totalorder %s81, %s82
      %p94 = scmp.eq.s32.totalorder %s18, 1
      %p95 = por %p93, %p94
      %p97 = scmp.ne.s32.totalorder %s82, %s96
      %p98 = scmp.eq.s32.totalorder %s18, 0
      %p99 = por %p97, %p98
      %s100 = ssub.s32 %s19, %s31
      %s101 = ssub.s32 %s20, %s27
      %s102 = sor.u32 %s100, %s101
      %p103 = scmp.eq.s32.totalorder %s102, 0
      %s105 = sadd.s32 %s104, 1
      %s106 = scalar_select %p103, %s104, %s105
      %p109 = pneg %p103
      %p110 = scmp.eq.s32.totalorder %s12, 1
      %p111 = por %p109, %p110
      %p112 = scmp.ne.s32.totalorder %s104, %s107
      %p113 = scmp.eq.s32.totalorder %s12, 0
      %p114 = por %p112, %p113
      %p115 = scmp.ne.s32.totalorder %s104, %s107
      %p116 = scmp.eq.s32.totalorder %s17, 1
      %p117 = por %p115, %p116
      %p118 = scmp.ne.s32.totalorder %s107, %s108
      %p119 = scmp.eq.s32.totalorder %s17, 0
      %p120 = por %p118, %p119
      %p121 = scmp.ne.s32.totalorder %s107, %s108
      %p122 = scmp.eq.s32.totalorder %s18, 1
      %p123 = por %p121, %p122
      %p125 = scmp.ne.s32.totalorder %s108, %s124
      %p126 = scmp.eq.s32.totalorder %s18, 0
      %p127 = por %p125, %p126
      %p128 = scmp.le.s32.totalorder 1, %s12
      %p129 = scmp.lt.s32.totalorder %s12, 3
      %p130 = pnand %p128, %p129
      %p131 = pneg %p130
      // Predicated region
      $region9: #{tpu_custom_call.1} parent=5 // pred_check
        _
      $region10: #{tpu_custom_call.1} parent=5 // pred_check_branch
        %133 = sbr.rel (%p130) target = $region12
      $region11: #{tpu_custom_call.1} parent=5 // pred_region
        %s134 = ssub.s32 %s12, 1
        // Predicated region
        $region13: #{tpu_custom_call.1} parent=11 // pred_check
          %p135 = pneg %p71
        $region14: #{tpu_custom_call.1} parent=11 // pred_check_branch
          %137 = sbr.rel (%p135) target = $region16
        $region15: #{tpu_custom_call.1} parent=11 // pred_region
          _
        $region16: #{tpu_custom_call.1} parent=11 // pred_fallthru
          _
        // Predicated region
        $region17: #{tpu_custom_call.1} parent=11 // pred_check
          %p138 = pneg %p92
        $region18: #{tpu_custom_call.1} parent=11 // pred_check_branch
          %140 = sbr.rel (%p138) target = $region20
        $region19: #{tpu_custom_call.1} parent=11 // pred_region
          _
        $region20: #{tpu_custom_call.1} parent=11 // pred_fallthru
          _
      $region12: #{tpu_custom_call.1} parent=5 // pred_fallthru
        _
      %p141 = scmp.lt.s32.totalorder %s12, 2
      // Predicated region
      $region21: #{tpu_custom_call.1} parent=5 // pred_check
        %p142 = pneg %p141
      $region22: #{tpu_custom_call.1} parent=5 // pred_check_branch
        %144 = sbr.rel (%p142) target = $region24
      $region23: #{tpu_custom_call.1} parent=5 // pred_region
        // Predicated region
        $region25: #{tpu_custom_call.1} parent=23 // pred_check
          %p145 = pneg %p44
        $region26: #{tpu_custom_call.1} parent=23 // pred_check_branch
          %147 = sbr.rel (%p145) target = $region28
        $region27: #{tpu_custom_call.1} parent=23 // pred_region
          %p148 = scmp.lt.s32.totalorder %s19, 1
          %s149 = scalar_select %p148, %s19, 1
          %s150 = smul.addr %s149, 54
          %s151 = smul.addr %s150, 8
          %s152 = scalar_lea.vmem %s0, %s151
        $region28: #{tpu_custom_call.1} parent=23 // pred_fallthru
          _
      $region24: #{tpu_custom_call.1} parent=5 // pred_fallthru
        _
      %p153 = scmp.le.s32.totalorder 1, %s12
      %p154 = scmp.lt.s32.totalorder %s12, 3
      %p155 = pnand %p153, %p154
      %p156 = pneg %p155
      // Predicated region
      $region29: #{tpu_custom_call.1} parent=5 // pred_check
        _
      $region30: #{tpu_custom_call.1} parent=5 // pred_check_branch
        %158 = sbr.rel (%p155) target = $region32
      $region31: #{tpu_custom_call.1} parent=5 // pred_region
        %s159 = ssub.s32 %s12, 1
        %p160 = scmp.lt.s32.totalorder %s21, 1
        %s161 = scalar_select %p160, %s21, 1
        %s162 = smul.addr %s161, 54
        %s163 = smul.addr %s162, 8
        %s164 = scalar_lea.vmem %s0, %s163
        %p165 = pneg %p50
        %p166 = pneg %p47
        %p167 = pneg %p71
        %p168 = pneg %p68
        %p169 = pneg %p92
        %p170 = pneg %p89
        %p171 = pneg %p120
        %p172 = pneg %p117
        %s173 = sand.u32 %s107, 1
        %s174 = scalar_lea.sflag [#allocation4], %s173
        %s175 = sand.u32 %s107, 1
        %s176 = smul.addr %s175, 256
        %s177 = scalar_lea.vmem [#allocation3], %s176
        %p178 = scmp.lt.s32.totalorder %s21, 1
        %s179 = scalar_select %p178, %s21, 1
        %s180 = smul.addr %s179, 54
        %s181 = smul.addr %s180, 8
        %s182 = scalar_lea.vmem %s0, %s181
        %s183 = smul.u32 32, %s22
        %s184 = smul.u32 %s22, 16
        %s185 = smul.u32 %s184, 24
        %s186 = scalar_lea.vmem %s182, %s185
        %v187 = vld [vmem:[%s186] sm:$0xff]
        %v188 = vld [vmem:[%s186 + $0x8] sm:$0xff]
        %v189 = vld [vmem:[%s186 + $0x18] sm:$0xff]
        %v190 = vld [vmem:[%s186 + $0x20] sm:$0xff]
        %v191 = vld [vmem:[%s186 + $0x30] sm:$0xff]
        %v192 = vld [vmem:[%s186 + $0x38] sm:$0xff]
        %v193 = vld [vmem:[%s186 + $0x48] sm:$0xff]
        %v194 = vld [vmem:[%s186 + $0x50] sm:$0xff]
        %v195 = vld [vmem:[%s186 + $0x60] sm:$0xff]
        %v196 = vld [vmem:[%s186 + $0x68] sm:$0xff]
        %v197 = vld [vmem:[%s186 + $0x78] sm:$0xff]
        %v198 = vld [vmem:[%s186 + $0x80] sm:$0xff]
        %v199 = vld [vmem:[%s186 + $0x90] sm:$0xff]
        %v200 = vld [vmem:[%s186 + $0x98] sm:$0xff]
        %v201 = vld [vmem:[%s186 + $0xa8] sm:$0xff]
        %v202 = vld [vmem:[%s186 + $0xb0] sm:$0xff]
        %v203 = vld [vmem:[%s186 + $0xc0] sm:$0xff]
        %v204 = vld [vmem:[%s186 + $0xc8] sm:$0xff]
        %v205 = vld [vmem:[%s186 + $0xd8] sm:$0xff]
        %v206 = vld [vmem:[%s186 + $0xe0] sm:$0xff]
        %v207 = vld [vmem:[%s186 + $0xf0] sm:$0xff]
        %v208 = vld [vmem:[%s186 + $0xf8] sm:$0xff]
        %v209 = vld [vmem:[%s186 + $0x108] sm:$0xff]
        %v210 = vld [vmem:[%s186 + $0x110] sm:$0xff]
        %v211 = vld [vmem:[%s186 + $0x120] sm:$0xff]
        %v212 = vld [vmem:[%s186 + $0x128] sm:$0xff]
        %v213 = vld [vmem:[%s186 + $0x138] sm:$0xff]
        %v214 = vld [vmem:[%s186 + $0x140] sm:$0xff]
        %v215 = vld [vmem:[%s186 + $0x150] sm:$0xff]
        %v216 = vld [vmem:[%s186 + $0x158] sm:$0xff]
        %v217 = vld [vmem:[%s186 + $0x168] sm:$0xff]
        %v218 = vld [vmem:[%s186 + $0x170] sm:$0xff]
        %vm219 = vcmask 31744
        %220 = vst.msk [vmem:[#allocation2] sm:$0xff] %vm219, %v187
        %221 = vst.msk [vmem:[#allocation2 + $0x8] sm:$0xff] %vm219, %v188
        %222 = vst.msk [vmem:[#allocation2 + $0x10] sm:$0xff] %vm219, %v189
        %223 = vst.msk [vmem:[#allocation2 + $0x18] sm:$0xff] %vm219, %v190
        %224 = vst.msk [vmem:[#allocation2 + $0x20] sm:$0xff] %vm219, %v191
        %225 = vst.msk [vmem:[#allocation2 + $0x28] sm:$0xff] %vm219, %v192
        %226 = vst.msk [vmem:[#allocation2 + $0x30] sm:$0xff] %vm219, %v193
        %227 = vst.msk [vmem:[#allocation2 + $0x38] sm:$0xff] %vm219, %v194
        %228 = vst.msk [vmem:[#allocation2 + $0x40] sm:$0xff] %vm219, %v195
        %229 = vst.msk [vmem:[#allocation2 + $0x48] sm:$0xff] %vm219, %v196
        %230 = vst.msk [vmem:[#allocation2 + $0x50] sm:$0xff] %vm219, %v197
        %231 = vst.msk [vmem:[#allocation2 + $0x58] sm:$0xff] %vm219, %v198
        %232 = vst.msk [vmem:[#allocation2 + $0x60] sm:$0xff] %vm219, %v199
        %233 = vst.msk [vmem:[#allocation2 + $0x68] sm:$0xff] %vm219, %v200
        %234 = vst.msk [vmem:[#allocation2 + $0x70] sm:$0xff] %vm219, %v201
        %235 = vst.msk [vmem:[#allocation2 + $0x78] sm:$0xff] %vm219, %v202
        %236 = vst.msk [vmem:[#allocation2 + $0x80] sm:$0xff] %vm219, %v203
        %237 = vst.msk [vmem:[#allocation2 + $0x88] sm:$0xff] %vm219, %v204
        %238 = vst.msk [vmem:[#allocation2 + $0x90] sm:$0xff] %vm219, %v205
        %239 = vst.msk [vmem:[#allocation2 + $0x98] sm:$0xff] %vm219, %v206
        %240 = vst.msk [vmem:[#allocation2 + $0xa0] sm:$0xff] %vm219, %v207
        %241 = vst.msk [vmem:[#allocation2 + $0xa8] sm:$0xff] %vm219, %v208
        %242 = vst.msk [vmem:[#allocation2 + $0xb0] sm:$0xff] %vm219, %v209
        %243 = vst.msk [vmem:[#allocation2 + $0xb8] sm:$0xff] %vm219, %v210
        %244 = vst.msk [vmem:[#allocation2 + $0xc0] sm:$0xff] %vm219, %v211
        %245 = vst.msk [vmem:[#allocation2 + $0xc8] sm:$0xff] %vm219, %v212
        %246 = vst.msk [vmem:[#allocation2 + $0xd0] sm:$0xff] %vm219, %v213
        %247 = vst.msk [vmem:[#allocation2 + $0xd8] sm:$0xff] %vm219, %v214
        %248 = vst.msk [vmem:[#allocation2 + $0xe0] sm:$0xff] %vm219, %v215
        %249 = vst.msk [vmem:[#allocation2 + $0xe8] sm:$0xff] %vm219, %v216
        %250 = vst.msk [vmem:[#allocation2 + $0xf0] sm:$0xff] %vm219, %v217
        %251 = vst.msk [vmem:[#allocation2 + $0xf8] sm:$0xff] %vm219, %v218
        %v252 = vld [vmem:[%s186 + $0x1] sm:$0xff]
        %v253 = vld [vmem:[%s186 + $0x9] sm:$0xff]
        %v254 = vld [vmem:[%s186 + $0x19] sm:$0xff]
        %v255 = vld [vmem:[%s186 + $0x21] sm:$0xff]
        %v256 = vld [vmem:[%s186 + $0x31] sm:$0xff]
        %v257 = vld [vmem:[%s186 + $0x39] sm:$0xff]
        %v258 = vld [vmem:[%s186 + $0x49] sm:$0xff]
        %v259 = vld [vmem:[%s186 + $0x51] sm:$0xff]
        %v260 = vld [vmem:[%s186 + $0x61] sm:$0xff]
        %v261 = vld [vmem:[%s186 + $0x69] sm:$0xff]
        %v262 = vld [vmem:[%s186 + $0x79] sm:$0xff]
        %v263 = vld [vmem:[%s186 + $0x81] sm:$0xff]
        %v264 = vld [vmem:[%s186 + $0x91] sm:$0xff]
        %v265 = vld [vmem:[%s186 + $0x99] sm:$0xff]
        %v266 = vld [vmem:[%s186 + $0xa9] sm:$0xff]
        %v267 = vld [vmem:[%s186 + $0xb1] sm:$0xff]
        %v268 = vld [vmem:[%s186 + $0xc1] sm:$0xff]
        %v269 = vld [vmem:[%s186 + $0xc9] sm:$0xff]
        %v270 = vld [vmem:[%s186 + $0xd9] sm:$0xff]
        %v271 = vld [vmem:[%s186 + $0xe1] sm:$0xff]
        %v272 = vld [vmem:[%s186 + $0xf1] sm:$0xff]
        %v273 = vld [vmem:[%s186 + $0xf9] sm:$0xff]
        %v274 = vld [vmem:[%s186 + $0x109] sm:$0xff]
        %v275 = vld [vmem:[%s186 + $0x111] sm:$0xff]
        %v276 = vld [vmem:[%s186 + $0x121] sm:$0xff]
        %v277 = vld [vmem:[%s186 + $0x129] sm:$0xff]
        %v278 = vld [vmem:[%s186 + $0x139] sm:$0xff]
        %v279 = vld [vmem:[%s186 + $0x141] sm:$0xff]
        %v280 = vld [vmem:[%s186 + $0x151] sm:$0xff]
        %v281 = vld [vmem:[%s186 + $0x159] sm:$0xff]
        %v282 = vld [vmem:[%s186 + $0x169] sm:$0xff]
        %v283 = vld [vmem:[%s186 + $0x171] sm:$0xff]
        %316 = vrot.lane.b32.xlu0 %v252, 4
        %v317 = vpop.permute.xlu0 %316
        %318 = vrot.lane.b32.xlu0 %v253, 4
        %v319 = vpop.permute.xlu0 %318
        %320 = vrot.lane.b32.xlu0 %v254, 4
        %v321 = vpop.permute.xlu0 %320
        %322 = vrot.lane.b32.xlu0 %v255, 4
        %v323 = vpop.permute.xlu0 %322
        %324 = vrot.lane.b32.xlu0 %v256, 4
        %v325 = vpop.permute.xlu0 %324
        %326 = vrot.lane.b32.xlu0 %v257, 4
        %v327 = vpop.permute.xlu0 %326
        %328 = vrot.lane.b32.xlu0 %v258, 4
        %v329 = vpop.permute.xlu0 %328
        %330 = vrot.lane.b32.xlu0 %v259, 4
        %v331 = vpop.permute.xlu0 %330
        %332 = vrot.lane.b32.xlu0 %v260, 4
        %v333 = vpop.permute.xlu0 %332
        %334 = vrot.lane.b32.xlu0 %v261, 4
        %v335 = vpop.permute.xlu0 %334
        %336 = vrot.lane.b32.xlu0 %v262, 4
        %v337 = vpop.permute.xlu0 %336
        %338 = vrot.lane.b32.xlu0 %v263, 4
        %v339 = vpop.permute.xlu0 %338
        %340 = vrot.lane.b32.xlu0 %v264, 4
        %v341 = vpop.permute.xlu0 %340
        %342 = vrot.lane.b32.xlu0 %v265, 4
        %v343 = vpop.permute.xlu0 %342
        %344 = vrot.lane.b32.xlu0 %v266, 4
        %v345 = vpop.permute.xlu0 %344
        %346 = vrot.lane.b32.xlu0 %v267, 4
        %v347 = vpop.permute.xlu0 %346
        %348 = vrot.lane.b32.xlu0 %v268, 4
        %v349 = vpop.permute.xlu0 %348
        %350 = vrot.lane.b32.xlu0 %v269, 4
        %v351 = vpop.permute.xlu0 %350
        %352 = vrot.lane.b32.xlu0 %v270, 4
        %v353 = vpop.permute.xlu0 %352
        %354 = vrot.lane.b32.xlu0 %v271, 4
        %v355 = vpop.permute.xlu0 %354
        %356 = vrot.lane.b32.xlu0 %v272, 4
        %v357 = vpop.permute.xlu0 %356
        %358 = vrot.lane.b32.xlu0 %v273, 4
        %v359 = vpop.permute.xlu0 %358
        %360 = vrot.lane.b32.xlu0 %v274, 4
        %v361 = vpop.permute.xlu0 %360
        %362 = vrot.lane.b32.xlu0 %v275, 4
        %v363 = vpop.permute.xlu0 %362
        %364 = vrot.lane.b32.xlu0 %v276, 4
        %v365 = vpop.permute.xlu0 %364
        %366 = vrot.lane.b32.xlu0 %v277, 4
        %v367 = vpop.permute.xlu0 %366
        %368 = vrot.lane.b32.xlu0 %v278, 4
        %v369 = vpop.permute.xlu0 %368
        %370 = vrot.lane.b32.xlu0 %v279, 4
        %v371 = vpop.permute.xlu0 %370
        %372 = vrot.lane.b32.xlu0 %v280, 4
        %v373 = vpop.permute.xlu0 %372
        %374 = vrot.lane.b32.xlu0 %v281, 4
        %v375 = vpop.permute.xlu0 %374
        %376 = vrot.lane.b32.xlu0 %v282, 4
        %v377 = vpop.permute.xlu0 %376
        %378 = vrot.lane.b32.xlu0 %v283, 4
        %v379 = vpop.permute.xlu0 %378
        %vm412 = vcmask 64544
        %413 = vst.msk [vmem:[#allocation2] sm:$0xff] %vm412, %v317
        %414 = vst.msk [vmem:[#allocation2 + $0x8] sm:$0xff] %vm412, %v319
        %415 = vst.msk [vmem:[#allocation2 + $0x10] sm:$0xff] %vm412, %v321
        %416 = vst.msk [vmem:[#allocation2 + $0x18] sm:$0xff] %vm412, %v323
        %417 = vst.msk [vmem:[#allocation2 + $0x20] sm:$0xff] %vm412, %v325
        %418 = vst.msk [vmem:[#allocation2 + $0x28] sm:$0xff] %vm412, %v327
        %419 = vst.msk [vmem:[#allocation2 + $0x30] sm:$0xff] %vm412, %v329
        %420 = vst.msk [vmem:[#allocation2 + $0x38] sm:$0xff] %vm412, %v331
        %421 = vst.msk [vmem:[#allocation2 + $0x40] sm:$0xff] %vm412, %v333
        %422 = vst.msk [vmem:[#allocation2 + $0x48] sm:$0xff] %vm412, %v335
        %423 = vst.msk [vmem:[#allocation2 + $0x50] sm:$0xff] %vm412, %v337
        %424 = vst.msk [vmem:[#allocation2 + $0x58] sm:$0xff] %vm412, %v339
        %425 = vst.msk [vmem:[#allocation2 + $0x60] sm:$0xff] %vm412, %v341
        %426 = vst.msk [vmem:[#allocation2 + $0x68] sm:$0xff] %vm412, %v343
        %427 = vst.msk [vmem:[#allocation2 + $0x70] sm:$0xff] %vm412, %v345
        %428 = vst.msk [vmem:[#allocation2 + $0x78] sm:$0xff] %vm412, %v347
        %429 = vst.msk [vmem:[#allocation2 + $0x80] sm:$0xff] %vm412, %v349
        %430 = vst.msk [vmem:[#allocation2 + $0x88] sm:$0xff] %vm412, %v351
        %431 = vst.msk [vmem:[#allocation2 + $0x90] sm:$0xff] %vm412, %v353
        %432 = vst.msk [vmem:[#allocation2 + $0x98] sm:$0xff] %vm412, %v355
        %433 = vst.msk [vmem:[#allocation2 + $0xa0] sm:$0xff] %vm412, %v357
        %434 = vst.msk [vmem:[#allocation2 + $0xa8] sm:$0xff] %vm412, %v359
        %435 = vst.msk [vmem:[#allocation2 + $0xb0] sm:$0xff] %vm412, %v361
        %436 = vst.msk [vmem:[#allocation2 + $0xb8] sm:$0xff] %vm412, %v363
        %437 = vst.msk [vmem:[#allocation2 + $0xc0] sm:$0xff] %vm412, %v365
        %438 = vst.msk [vmem:[#allocation2 + $0xc8] sm:$0xff] %vm412, %v367
        %439 = vst.msk [vmem:[#allocation2 + $0xd0] sm:$0xff] %vm412, %v369
        %440 = vst.msk [vmem:[#allocation2 + $0xd8] sm:$0xff] %vm412, %v371
        %441 = vst.msk [vmem:[#allocation2 + $0xe0] sm:$0xff] %vm412, %v373
        %442 = vst.msk [vmem:[#allocation2 + $0xe8] sm:$0xff] %vm412, %v375
        %443 = vst.msk [vmem:[#allocation2 + $0xf0] sm:$0xff] %vm412, %v377
        %444 = vst.msk [vmem:[#allocation2 + $0xf8] sm:$0xff] %vm412, %v379
        %v445 = vld [vmem:[%s186 + $0x2] sm:$0xff]
        %v446 = vld [vmem:[%s186 + $0xa] sm:$0xff]
        %v447 = vld [vmem:[%s186 + $0x1a] sm:$0xff]
        %v448 = vld [vmem:[%s186 + $0x22] sm:$0xff]
        %v449 = vld [vmem:[%s186 + $0x32] sm:$0xff]
        %v450 = vld [vmem:[%s186 + $0x3a] sm:$0xff]
        %v451 = vld [vmem:[%s186 + $0x4a] sm:$0xff]
        %v452 = vld [vmem:[%s186 + $0x52] sm:$0xff]
        %v453 = vld [vmem:[%s186 + $0x62] sm:$0xff]
        %v454 = vld [vmem:[%s186 + $0x6a] sm:$0xff]
        %v455 = vld [vmem:[%s186 + $0x7a] sm:$0xff]
        %v456 = vld [vmem:[%s186 + $0x82] sm:$0xff]
        %v457 = vld [vmem:[%s186 + $0x92] sm:$0xff]
        %v458 = vld [vmem:[%s186 + $0x9a] sm:$0xff]
        %v459 = vld [vmem:[%s186 + $0xaa] sm:$0xff]
        %v460 = vld [vmem:[%s186 + $0xb2] sm:$0xff]
        %v461 = vld [vmem:[%s186 + $0xc2] sm:$0xff]
        %v462 = vld [vmem:[%s186 + $0xca] sm:$0xff]
        %v463 = vld [vmem:[%s186 + $0xda] sm:$0xff]
        %v464 = vld [vmem:[%s186 + $0xe2] sm:$0xff]
        %v465 = vld [vmem:[%s186 + $0xf2] sm:$0xff]
        %v466 = vld [vmem:[%s186 + $0xfa] sm:$0xff]
        %v467 = vld [vmem:[%s186 + $0x10a] sm:$0xff]
        %v468 = vld [vmem:[%s186 + $0x112] sm:$0xff]
        %v469 = vld [vmem:[%s186 + $0x122] sm:$0xff]
        %v470 = vld [vmem:[%s186 + $0x12a] sm:$0xff]
        %v471 = vld [vmem:[%s186 + $0x13a] sm:$0xff]
        %v472 = vld [vmem:[%s186 + $0x142] sm:$0xff]
        %v473 = vld [vmem:[%s186 + $0x152] sm:$0xff]
        %v474 = vld [vmem:[%s186 + $0x15a] sm:$0xff]
        %v475 = vld [vmem:[%s186 + $0x16a] sm:$0xff]
        %v476 = vld [vmem:[%s186 + $0x172] sm:$0xff]
        %509 = vrot.lane.b32.xlu0 %v445, 8
        %v510 = vpop.permute.xlu0 %509
        %511 = vrot.lane.b32.xlu0 %v446, 8
        %v512 = vpop.permute.xlu0 %511
        %513 = vrot.lane.b32.xlu0 %v447, 8
        %v514 = vpop.permute.xlu0 %513
        %515 = vrot.lane.b32.xlu0 %v448, 8
        %v516 = vpop.permute.xlu0 %515
        %517 = vrot.lane.b32.xlu0 %v449, 8
        %v518 = vpop.permute.xlu0 %517
        %519 = vrot.lane.b32.xlu0 %v450, 8
        %v520 = vpop.permute.xlu0 %519
        %521 = vrot.lane.b32.xlu0 %v451, 8
        %v522 = vpop.permute.xlu0 %521
        %523 = vrot.lane.b32.xlu0 %v452, 8
        %v524 = vpop.permute.xlu0 %523
        %525 = vrot.lane.b32.xlu0 %v453, 8
        %v526 = vpop.permute.xlu0 %525
        %527 = vrot.lane.b32.xlu0 %v454, 8
        %v528 = vpop.permute.xlu0 %527
        %529 = vrot.lane.b32.xlu0 %v455, 8
        %v530 = vpop.permute.xlu0 %529
        %531 = vrot.lane.b32.xlu0 %v456, 8
        %v532 = vpop.permute.xlu0 %531
        %533 = vrot.lane.b32.xlu0 %v457, 8
        %v534 = vpop.permute.xlu0 %533
        %535 = vrot.lane.b32.xlu0 %v458, 8
        %v536 = vpop.permute.xlu0 %535
        %537 = vrot.lane.b32.xlu0 %v459, 8
        %v538 = vpop.permute.xlu0 %537
        %539 = vrot.lane.b32.xlu0 %v460, 8
        %v540 = vpop.permute.xlu0 %539
        %541 = vrot.lane.b32.xlu0 %v461, 8
        %v542 = vpop.permute.xlu0 %541
        %543 = vrot.lane.b32.xlu0 %v462, 8
        %v544 = vpop.permute.xlu0 %543
        %545 = vrot.lane.b32.xlu0 %v463, 8
        %v546 = vpop.permute.xlu0 %545
        %547 = vrot.lane.b32.xlu0 %v464, 8
        %v548 = vpop.permute.xlu0 %547
        %549 = vrot.lane.b32.xlu0 %v465, 8
        %v550 = vpop.permute.xlu0 %549
        %551 = vrot.lane.b32.xlu0 %v466, 8
        %v552 = vpop.permute.xlu0 %551
        %553 = vrot.lane.b32.xlu0 %v467, 8
        %v554 = vpop.permute.xlu0 %553
        %555 = vrot.lane.b32.xlu0 %v468, 8
        %v556 = vpop.permute.xlu0 %555
        %557 = vrot.lane.b32.xlu0 %v469, 8
        %v558 = vpop.permute.xlu0 %557
        %559 = vrot.lane.b32.xlu0 %v470, 8
        %v560 = vpop.permute.xlu0 %559
        %561 = vrot.lane.b32.xlu0 %v471, 8
        %v562 = vpop.permute.xlu0 %561
        %563 = vrot.lane.b32.xlu0 %v472, 8
        %v564 = vpop.permute.xlu0 %563
        %565 = vrot.lane.b32.xlu0 %v473, 8
        %v566 = vpop.permute.xlu0 %565
        %567 = vrot.lane.b32.xlu0 %v474, 8
        %v568 = vpop.permute.xlu0 %567
        %569 = vrot.lane.b32.xlu0 %v475, 8
        %v570 = vpop.permute.xlu0 %569
        %571 = vrot.lane.b32.xlu0 %v476, 8
        %v572 = vpop.permute.xlu0 %571
        %vm605 = vcmask 97344
        %606 = vst.msk [vmem:[#allocation2] sm:$0xff] %vm605, %v510
        %607 = vst.msk [vmem:[#allocation2 + $0x8] sm:$0xff] %vm605, %v512
        %608 = vst.msk [vmem:[#allocation2 + $0x10] sm:$0xff] %vm605, %v514
        %609 = vst.msk [vmem:[#allocation2 + $0x18] sm:$0xff] %vm605, %v516
        %610 = vst.msk [vmem:[#allocation2 + $0x20] sm:$0xff] %vm605, %v518
        %611 = vst.msk [vmem:[#allocation2 + $0x28] sm:$0xff] %vm605, %v520
        %612 = vst.msk [vmem:[#allocation2 + $0x30] sm:$0xff] %vm605, %v522
        %613 = vst.msk [vmem:[#allocation2 + $0x38] sm:$0xff] %vm605, %v524
        %614 = vst.msk [vmem:[#allocation2 + $0x40] sm:$0xff] %vm605, %v526
        %615 = vst.msk [vmem:[#allocation2 + $0x48] sm:$0xff] %vm605, %v528
        %616 = vst.msk [vmem:[#allocation2 + $0x50] sm:$0xff] %vm605, %v530
        %617 = vst.msk [vmem:[#allocation2 + $0x58] sm:$0xff] %vm605, %v532
        %618 = vst.msk [vmem:[#allocation2 + $0x60] sm:$0xff] %vm605, %v534
        %619 = vst.msk [vmem:[#allocation2 + $0x68] sm:$0xff] %vm605, %v536
        %620 = vst.msk [vmem:[#allocation2 + $0x70] sm:$0xff] %vm605, %v538
        %621 = vst.msk [vmem:[#allocation2 + $0x78] sm:$0xff] %vm605, %v540
        %622 = vst.msk [vmem:[#allocation2 + $0x80] sm:$0xff] %vm605, %v542
        %623 = vst.msk [vmem:[#allocation2 + $0x88] sm:$0xff] %vm605, %v544
        %624 = vst.msk [vmem:[#allocation2 + $0x90] sm:$0xff] %vm605, %v546
        %625 = vst.msk [vmem:[#allocation2 + $0x98] sm:$0xff] %vm605, %v548
        %626 = vst.msk [vmem:[#allocation2 + $0xa0] sm:$0xff] %vm605, %v550
        %627 = vst.msk [vmem:[#allocation2 + $0xa8] sm:$0xff] %vm605, %v552
        %628 = vst.msk [vmem:[#allocation2 + $0xb0] sm:$0xff] %vm605, %v554
        %629 = vst.msk [vmem:[#allocation2 + $0xb8] sm:$0xff] %vm605, %v556
        %630 = vst.msk [vmem:[#allocation2 + $0xc0] sm:$0xff] %vm605, %v558
        %631 = vst.msk [vmem:[#allocation2 + $0xc8] sm:$0xff] %vm605, %v560
        %632 = vst.msk [vmem:[#allocation2 + $0xd0] sm:$0xff] %vm605, %v562
        %633 = vst.msk [vmem:[#allocation2 + $0xd8] sm:$0xff] %vm605, %v564
        %634 = vst.msk [vmem:[#allocation2 + $0xe0] sm:$0xff] %vm605, %v566
        %635 = vst.msk [vmem:[#allocation2 + $0xe8] sm:$0xff] %vm605, %v568
        %636 = vst.msk [vmem:[#allocation2 + $0xf0] sm:$0xff] %vm605, %v570
        %637 = vst.msk [vmem:[#allocation2 + $0xf8] sm:$0xff] %vm605, %v572
        %s638 = sadd.s32 %s184, 1
        %s639 = smul.u32 %s638, 24
        %s640 = scalar_lea.vmem %s182, %s639
        %v641 = vld [vmem:[%s640] sm:$0xff]
        %v642 = vld [vmem:[%s640 + $0x8] sm:$0xff]
        %v643 = vld [vmem:[%s640 + $0x18] sm:$0xff]
        %v644 = vld [vmem:[%s640 + $0x20] sm:$0xff]
        %v645 = vld [vmem:[%s640 + $0x30] sm:$0xff]
        %v646 = vld [vmem:[%s640 + $0x38] sm:$0xff]
        %v647 = vld [vmem:[%s640 + $0x48] sm:$0xff]
        %v648 = vld [vmem:[%s640 + $0x50] sm:$0xff]
        %v649 = vld [vmem:[%s640 + $0x60] sm:$0xff]
        %v650 = vld [vmem:[%s640 + $0x68] sm:$0xff]
        %v651 = vld [vmem:[%s640 + $0x78] sm:$0xff]
        %v652 = vld [vmem:[%s640 + $0x80] sm:$0xff]
        %v653 = vld [vmem:[%s640 + $0x90] sm:$0xff]
        %v654 = vld [vmem:[%s640 + $0x98] sm:$0xff]
        %v655 = vld [vmem:[%s640 + $0xa8] sm:$0xff]
        %v656 = vld [vmem:[%s640 + $0xb0] sm:$0xff]
        %v657 = vld [vmem:[%s640 + $0xc0] sm:$0xff]
        %v658 = vld [vmem:[%s640 + $0xc8] sm:$0xff]
        %v659 = vld [vmem:[%s640 + $0xd8] sm:$0xff]
        %v660 = vld [vmem:[%s640 + $0xe0] sm:$0xff]
        %v661 = vld [vmem:[%s640 + $0xf0] sm:$0xff]
        %v662 = vld [vmem:[%s640 + $0xf8] sm:$0xff]
        %v663 = vld [vmem:[%s640 + $0x108] sm:$0xff]
        %v664 = vld [vmem:[%s640 + $0x110] sm:$0xff]
        %v665 = vld [vmem:[%s640 + $0x120] sm:$0xff]
        %v666 = vld [vmem:[%s640 + $0x128] sm:$0xff]
        %v667 = vld [vmem:[%s640 + $0x138] sm:$0xff]
        %v668 = vld [vmem:[%s640 + $0x140] sm:$0xff]
        %v669 = vld [vmem:[%s640 + $0x150] sm:$0xff]
        %v670 = vld [vmem:[%s640 + $0x158] sm:$0xff]
        %v671 = vld [vmem:[%s640 + $0x168] sm:$0xff]
        %v672 = vld [vmem:[%s640 + $0x170] sm:$0xff]
        %705 = vrot.lane.b32.xlu0 %v641, 12
        %v706 = vpop.permute.xlu0 %705
        %707 = vrot.lane.b32.xlu0 %v642, 12
        %v708 = vpop.permute.xlu0 %707
        %709 = vrot.lane.b32.xlu0 %v643, 12
        %v710 = vpop.permute.xlu0 %709
        %711 = vrot.lane.b32.xlu0 %v644, 12
        %v712 = vpop.permute.xlu0 %711
        %713 = vrot.lane.b32.xlu0 %v645, 12
        %v714 = vpop.permute.xlu0 %713
        %715 = vrot.lane.b32.xlu0 %v646, 12
        %v716 = vpop.permute.xlu0 %715
        %717 = vrot.lane.b32.xlu0 %v647, 12
        %v718 = vpop.permute.xlu0 %717
        %719 = vrot.lane.b32.xlu0 %v648, 12
        %v720 = vpop.permute.xlu0 %719
        %721 = vrot.lane.b32.xlu0 %v649, 12
        %v722 = vpop.permute.xlu0 %721
        %723 = vrot.lane.b32.xlu0 %v650, 12
        %v724 = vpop.permute.xlu0 %723
        %725 = vrot.lane.b32.xlu0 %v651, 12
        %v726 = vpop.permute.xlu0 %725
        %727 = vrot.lane.b32.xlu0 %v652, 12
        %v728 = vpop.permute.xlu0 %727
        %729 = vrot.lane.b32.xlu0 %v653, 12
        %v730 = vpop.permute.xlu0 %729
        %731 = vrot.lane.b32.xlu0 %v654, 12
        %v732 = vpop.permute.xlu0 %731
        %733 = vrot.lane.b32.xlu0 %v655, 12
        %v734 = vpop.permute.xlu0 %733
        %735 = vrot.lane.b32.xlu0 %v656, 12
        %v736 = vpop.permute.xlu0 %735
        %737 = vrot.lane.b32.xlu0 %v657, 12
        %v738 = vpop.permute.xlu0 %737
        %739 = vrot.lane.b32.xlu0 %v658, 12
        %v740 = vpop.permute.xlu0 %739
        %741 = vrot.lane.b32.xlu0 %v659, 12
        %v742 = vpop.permute.xlu0 %741
        %743 = vrot.lane.b32.xlu0 %v660, 12
        %v744 = vpop.permute.xlu0 %743
        %745 = vrot.lane.b32.xlu0 %v661, 12
        %v746 = vpop.permute.xlu0 %745
        %747 = vrot.lane.b32.xlu0 %v662, 12
        %v748 = vpop.permute.xlu0 %747
        %749 = vrot.lane.b32.xlu0 %v663, 12
        %v750 = vpop.permute.xlu0 %749
        %751 = vrot.lane.b32.xlu0 %v664, 12
        %v752 = vpop.permute.xlu0 %751
        %753 = vrot.lane.b32.xlu0 %v665, 12
        %v754 = vpop.permute.xlu0 %753
        %755 = vrot.lane.b32.xlu0 %v666, 12
        %v756 = vpop.permute.xlu0 %755
        %757 = vrot.lane.b32.xlu0 %v667, 12
        %v758 = vpop.permute.xlu0 %757
        %759 = vrot.lane.b32.xlu0 %v668, 12
        %v760 = vpop.permute.xlu0 %759
        %761 = vrot.lane.b32.xlu0 %v669, 12
        %v762 = vpop.permute.xlu0 %761
        %763 = vrot.lane.b32.xlu0 %v670, 12
        %v764 = vpop.permute.xlu0 %763
        %765 = vrot.lane.b32.xlu0 %v671, 12
        %v766 = vpop.permute.xlu0 %765
        %767 = vrot.lane.b32.xlu0 %v672, 12
        %v768 = vpop.permute.xlu0 %767
        %vm801 = vcmask 130144
        %802 = vst.msk [vmem:[#allocation2] sm:$0xff] %vm801, %v706
        %803 = vst.msk [vmem:[#allocation2 + $0x8] sm:$0xff] %vm801, %v708
        %804 = vst.msk [vmem:[#allocation2 + $0x10] sm:$0xff] %vm801, %v710
        %805 = vst.msk [vmem:[#allocation2 + $0x18] sm:$0xff] %vm801, %v712
        %806 = vst.msk [vmem:[#allocation2 + $0x20] sm:$0xff] %vm801, %v714
        %807 = vst.msk [vmem:[#allocation2 + $0x28] sm:$0xff] %vm801, %v716
        %808 = vst.msk [vmem:[#allocation2 + $0x30] sm:$0xff] %vm801, %v718
        %809 = vst.msk [vmem:[#allocation2 + $0x38] sm:$0xff] %vm801, %v720
        %810 = vst.msk [vmem:[#allocation2 + $0x40] sm:$0xff] %vm801, %v722
        %811 = vst.msk [vmem:[#allocation2 + $0x48] sm:$0xff] %vm801, %v724
        %812 = vst.msk [vmem:[#allocation2 + $0x50] sm:$0xff] %vm801, %v726
        %813 = vst.msk [vmem:[#allocation2 + $0x58] sm:$0xff] %vm801, %v728
        %814 = vst.msk [vmem:[#allocation2 + $0x60] sm:$0xff] %vm801, %v730
        %815 = vst.msk [vmem:[#allocation2 + $0x68] sm:$0xff] %vm801, %v732
        %816 = vst.msk [vmem:[#allocation2 + $0x70] sm:$0xff] %vm801, %v734
        %817 = vst.msk [vmem:[#allocation2 + $0x78] sm:$0xff] %vm801, %v736
        %818 = vst.msk [vmem:[#allocation2 + $0x80] sm:$0xff] %vm801, %v738
        %819 = vst.msk [vmem:[#allocation2 + $0x88] sm:$0xff] %vm801, %v740
        %820 = vst.msk [vmem:[#allocation2 + $0x90] sm:$0xff] %vm801, %v742
        %821 = vst.msk [vmem:[#allocation2 + $0x98] sm:$0xff] %vm801, %v744
        %822 = vst.msk [vmem:[#allocation2 + $0xa0] sm:$0xff] %vm801, %v746
        %823 = vst.msk [vmem:[#allocation2 + $0xa8] sm:$0xff] %vm801, %v748
        %824 = vst.msk [vmem:[#allocation2 + $0xb0] sm:$0xff] %vm801, %v750
        %825 = vst.msk [vmem:[#allocation2 + $0xb8] sm:$0xff] %vm801, %v752
        %826 = vst.msk [vmem:[#allocation2 + $0xc0] sm:$0xff] %vm801, %v754
        %827 = vst.msk [vmem:[#allocation2 + $0xc8] sm:$0xff] %vm801, %v756
        %828 = vst.msk [vmem:[#allocation2 + $0xd0] sm:$0xff] %vm801, %v758
        %829 = vst.msk [vmem:[#allocation2 + $0xd8] sm:$0xff] %vm801, %v760
        %830 = vst.msk [vmem:[#allocation2 + $0xe0] sm:$0xff] %vm801, %v762
        %831 = vst.msk [vmem:[#allocation2 + $0xe8] sm:$0xff] %vm801, %v764
        %832 = vst.msk [vmem:[#allocation2 + $0xf0] sm:$0xff] %vm801, %v766
        %833 = vst.msk [vmem:[#allocation2 + $0xf8] sm:$0xff] %vm801, %v768
        %v834 = vld [vmem:[%s640 + $0x1] sm:$0xff]
        %v835 = vld [vmem:[%s640 + $0x9] sm:$0xff]
        %v836 = vld [vmem:[%s640 + $0x19] sm:$0xff]
        %v837 = vld [vmem:[%s640 + $0x21] sm:$0xff]
        %v838 = vld [vmem:[%s640 + $0x31] sm:$0xff]
        %v839 = vld [vmem:[%s640 + $0x39] sm:$0xff]
        %v840 = vld [vmem:[%s640 + $0x49] sm:$0xff]
        %v841 = vld [vmem:[%s640 + $0x51] sm:$0xff]
        %v842 = vld [vmem:[%s640 + $0x61] sm:$0xff]
        %v843 = vld [vmem:[%s640 + $0x69] sm:$0xff]
        %v844 = vld [vmem:[%s640 + $0x79] sm:$0xff]
        %v845 = vld [vmem:[%s640 + $0x81] sm:$0xff]
        %v846 = vld [vmem:[%s640 + $0x91] sm:$0xff]
        %v847 = vld [vmem:[%s640 + $0x99] sm:$0xff]
        %v848 = vld [vmem:[%s640 + $0xa9] sm:$0xff]
        %v849 = vld [vmem:[%s640 + $0xb1] sm:$0xff]
        %v850 = vld [vmem:[%s640 + $0xc1] sm:$0xff]
        %v851 = vld [vmem:[%s640 + $0xc9] sm:$0xff]
        %v852 = vld [vmem:[%s640 + $0xd9] sm:$0xff]
        %v853 = vld [vmem:[%s640 + $0xe1] sm:$0xff]
        %v854 = vld [vmem:[%s640 + $0xf1] sm:$0xff]
        %v855 = vld [vmem:[%s640 + $0xf9] sm:$0xff]
        %v856 = vld [vmem:[%s640 + $0x109] sm:$0xff]
        %v857 = vld [vmem:[%s640 + $0x111] sm:$0xff]
        %v858 = vld [vmem:[%s640 + $0x121] sm:$0xff]
        %v859 = vld [vmem:[%s640 + $0x129] sm:$0xff]
        %v860 = vld [vmem:[%s640 + $0x139] sm:$0xff]
        %v861 = vld [vmem:[%s640 + $0x141] sm:$0xff]
        %v862 = vld [vmem:[%s640 + $0x151] sm:$0xff]
        %v863 = vld [vmem:[%s640 + $0x159] sm:$0xff]
        %v864 = vld [vmem:[%s640 + $0x169] sm:$0xff]
        %v865 = vld [vmem:[%s640 + $0x171] sm:$0xff]
        %898 = vrot.lane.b32.xlu0 %v834, 16
        %v899 = vpop.permute.xlu0 %898
        %900 = vrot.lane.b32.xlu0 %v835, 16
        %v901 = vpop.permute.xlu0 %900
        %902 = vrot.lane.b32.xlu0 %v836, 16
        %v903 = vpop.permute.xlu0 %902
        %904 = vrot.lane.b32.xlu0 %v837, 16
        %v905 = vpop.permute.xlu0 %904
        %906 = vrot.lane.b32.xlu0 %v838, 16
        %v907 = vpop.permute.xlu0 %906
        %908 = vrot.lane.b32.xlu0 %v839, 16
        %v909 = vpop.permute.xlu0 %908
        %910 = vrot.lane.b32.xlu0 %v840, 16
        %v911 = vpop.permute.xlu0 %910
        %912 = vrot.lane.b32.xlu0 %v841, 16
        %v913 = vpop.permute.xlu0 %912
        %914 = vrot.lane.b32.xlu0 %v842, 16
        %v915 = vpop.permute.xlu0 %914
        %916 = vrot.lane.b32.xlu0 %v843, 16
        %v917 = vpop.permute.xlu0 %916
        %918 = vrot.lane.b32.xlu0 %v844, 16
        %v919 = vpop.permute.xlu0 %918
        %920 = vrot.lane.b32.xlu0 %v845, 16
        %v921 = vpop.permute.xlu0 %920
        %922 = vrot.lane.b32.xlu0 %v846, 16
        %v923 = vpop.permute.xlu0 %922
        %924 = vrot.lane.b32.xlu0 %v847, 16
        %v925 = vpop.permute.xlu0 %924
        %926 = vrot.lane.b32.xlu0 %v848, 16
        %v927 = vpop.permute.xlu0 %926
        %928 = vrot.lane.b32.xlu0 %v849, 16
        %v929 = vpop.permute.xlu0 %928
        %930 = vrot.lane.b32.xlu0 %v850, 16
        %v931 = vpop.permute.xlu0 %930
        %932 = vrot.lane.b32.xlu0 %v851, 16
        %v933 = vpop.permute.xlu0 %932
        %934 = vrot.lane.b32.xlu0 %v852, 16
        %v935 = vpop.permute.xlu0 %934
        %936 = vrot.lane.b32.xlu0 %v853, 16
        %v937 = vpop.permute.xlu0 %936
        %938 = vrot.lane.b32.xlu0 %v854, 16
        %v939 = vpop.permute.xlu0 %938
        %940 = vrot.lane.b32.xlu0 %v855, 16
        %v941 = vpop.permute.xlu0 %940
        %942 = vrot.lane.b32.xlu0 %v856, 16
        %v943 = vpop.permute.xlu0 %942
        %944 = vrot.lane.b32.xlu0 %v857, 16
        %v945 = vpop.permute.xlu0 %944
        %946 = vrot.lane.b32.xlu0 %v858, 16
        %v947 = vpop.permute.xlu0 %946
        %948 = vrot.lane.b32.xlu0 %v859, 16
        %v949 = vpop.permute.xlu0 %948
        %950 = vrot.lane.b32.xlu0 %v860, 16
        %v951 = vpop.permute.xlu0 %950
        %952 = vrot.lane.b32.xlu0 %v861, 16
        %v953 = vpop.permute.xlu0 %952
        %954 = vrot.lane.b32.xlu0 %v862, 16
        %v955 = vpop.permute.xlu0 %954
        %956 = vrot.lane.b32.xlu0 %v863, 16
        %v957 = vpop.permute.xlu0 %956
        %958 = vrot.lane.b32.xlu0 %v864, 16
        %v959 = vpop.permute.xlu0 %958
        %960 = vrot.lane.b32.xlu0 %v865, 16
        %v961 = vpop.permute.xlu0 %960
        %vm994 = vcmask 162944
        %995 = vst.msk [vmem:[#allocation2] sm:$0xff] %vm994, %v899
        %996 = vst.msk [vmem:[#allocation2 + $0x8] sm:$0xff] %vm994, %v901
        %997 = vst.msk [vmem:[#allocation2 + $0x10] sm:$0xff] %vm994, %v903
        %998 = vst.msk [vmem:[#allocation2 + $0x18] sm:$0xff] %vm994, %v905
        %999 = vst.msk [vmem:[#allocation2 + $0x20] sm:$0xff] %vm994, %v907
        %1000 = vst.msk [vmem:[#allocation2 + $0x28] sm:$0xff] %vm994, %v909
        %1001 = vst.msk [vmem:[#allocation2 + $0x30] sm:$0xff] %vm994, %v911
        %1002 = vst.msk [vmem:[#allocation2 + $0x38] sm:$0xff] %vm994, %v913
        %1003 = vst.msk [vmem:[#allocation2 + $0x40] sm:$0xff] %vm994, %v915
        %1004 = vst.msk [vmem:[#allocation2 + $0x48] sm:$0xff] %vm994, %v917
        %1005 = vst.msk [vmem:[#allocation2 + $0x50] sm:$0xff] %vm994, %v919
        %1006 = vst.msk [vmem:[#allocation2 + $0x58] sm:$0xff] %vm994, %v921
        %1007 = vst.msk [vmem:[#allocation2 + $0x60] sm:$0xff] %vm994, %v923
        %1008 = vst.msk [vmem:[#allocation2 + $0x68] sm:$0xff] %vm994, %v925
        %1009 = vst.msk [vmem:[#allocation2 + $0x70] sm:$0xff] %vm994, %v927
        %1010 = vst.msk [vmem:[#allocation2 + $0x78] sm:$0xff] %vm994, %v929
        %1011 = vst.msk [vmem:[#allocation2 + $0x80] sm:$0xff] %vm994, %v931
        %1012 = vst.msk [vmem:[#allocation2 + $0x88] sm:$0xff] %vm994, %v933
        %1013 = vst.msk [vmem:[#allocation2 + $0x90] sm:$0xff] %vm994, %v935
        %1014 = vst.msk [vmem:[#allocation2 + $0x98] sm:$0xff] %vm994, %v937
        %1015 = vst.msk [vmem:[#allocation2 + $0xa0] sm:$0xff] %vm994, %v939
        %1016 = vst.msk [vmem:[#allocation2 + $0xa8] sm:$0xff] %vm994, %v941
        %1017 = vst.msk [vmem:[#allocation2 + $0xb0] sm:$0xff] %vm994, %v943
        %1018 = vst.msk [vmem:[#allocation2 + $0xb8] sm:$0xff] %vm994, %v945
        %1019 = vst.msk [vmem:[#allocation2 + $0xc0] sm:$0xff] %vm994, %v947
        %1020 = vst.msk [vmem:[#allocation2 + $0xc8] sm:$0xff] %vm994, %v949
        %1021 = vst.msk [vmem:[#allocation2 + $0xd0] sm:$0xff] %vm994, %v951
        %1022 = vst.msk [vmem:[#allocation2 + $0xd8] sm:$0xff] %vm994, %v953
        %1023 = vst.msk [vmem:[#allocation2 + $0xe0] sm:$0xff] %vm994, %v955
        %1024 = vst.msk [vmem:[#allocation2 + $0xe8] sm:$0xff] %vm994, %v957
        %1025 = vst.msk [vmem:[#allocation2 + $0xf0] sm:$0xff] %vm994, %v959
        %1026 = vst.msk [vmem:[#allocation2 + $0xf8] sm:$0xff] %vm994, %v961
        %v1027 = vld [vmem:[%s640 + $0x2] sm:$0xff]
        %v1028 = vld [vmem:[%s640 + $0xa] sm:$0xff]
        %v1029 = vld [vmem:[%s640 + $0x1a] sm:$0xff]
        %v1030 = vld [vmem:[%s640 + $0x22] sm:$0xff]
        %v1031 = vld [vmem:[%s640 + $0x32] sm:$0xff]
        %v1032 = vld [vmem:[%s640 + $0x3a] sm:$0xff]
        %v1033 = vld [vmem:[%s640 + $0x4a] sm:$0xff]
        %v1034 = vld [vmem:[%s640 + $0x52] sm:$0xff]
        %v1035 = vld [vmem:[%s640 + $0x62] sm:$0xff]
        %v1036 = vld [vmem:[%s640 + $0x6a] sm:$0xff]
        %v1037 = vld [vmem:[%s640 + $0x7a] sm:$0xff]
        %v1038 = vld [vmem:[%s640 + $0x82] sm:$0xff]
        %v1039 = vld [vmem:[%s640 + $0x92] sm:$0xff]
        %v1040 = vld [vmem:[%s640 + $0x9a] sm:$0xff]
        %v1041 = vld [vmem:[%s640 + $0xaa] sm:$0xff]
        %v1042 = vld [vmem:[%s640 + $0xb2] sm:$0xff]
        %v1043 = vld [vmem:[%s640 + $0xc2] sm:$0xff]
        %v1044 = vld [vmem:[%s640 + $0xca] sm:$0xff]
        %v1045 = vld [vmem:[%s640 + $0xda] sm:$0xff]
        %v1046 = vld [vmem:[%s640 + $0xe2] sm:$0xff]
        %v1047 = vld [vmem:[%s640 + $0xf2] sm:$0xff]
        %v1048 = vld [vmem:[%s640 + $0xfa] sm:$0xff]
        %v1049 = vld [vmem:[%s640 + $0x10a] sm:$0xff]
        %v1050 = vld [vmem:[%s640 + $0x112] sm:$0xff]
        %v1051 = vld [vmem:[%s640 + $0x122] sm:$0xff]
        %v1052 = vld [vmem:[%s640 + $0x12a] sm:$0xff]
        %v1053 = vld [vmem:[%s640 + $0x13a] sm:$0xff]
        %v1054 = vld [vmem:[%s640 + $0x142] sm:$0xff]
        %v1055 = vld [vmem:[%s640 + $0x152] sm:$0xff]
        %v1056 = vld [vmem:[%s640 + $0x15a] sm:$0xff]
        %v1057 = vld [vmem:[%s640 + $0x16a] sm:$0xff]
        %v1058 = vld [vmem:[%s640 + $0x172] sm:$0xff]
        %1091 = vrot.lane.b32.xlu0 %v1027, 20
        %v1092 = vpop.permute.xlu0 %1091
        %1093 = vrot.lane.b32.xlu0 %v1028, 20
        %v1094 = vpop.permute.xlu0 %1093
        %1095 = vrot.lane.b32.xlu0 %v1029, 20
        %v1096 = vpop.permute.xlu0 %1095
        %1097 = vrot.lane.b32.xlu0 %v1030, 20
        %v1098 = vpop.permute.xlu0 %1097
        %1099 = vrot.lane.b32.xlu0 %v1031, 20
        %v1100 = vpop.permute.xlu0 %1099
        %1101 = vrot.lane.b32.xlu0 %v1032, 20
        %v1102 = vpop.permute.xlu0 %1101
        %1103 = vrot.lane.b32.xlu0 %v1033, 20
        %v1104 = vpop.permute.xlu0 %1103
        %1105 = vrot.lane.b32.xlu0 %v1034, 20
        %v1106 = vpop.permute.xlu0 %1105
        %1107 = vrot.lane.b32.xlu0 %v1035, 20
        %v1108 = vpop.permute.xlu0 %1107
        %1109 = vrot.lane.b32.xlu0 %v1036, 20
        %v1110 = vpop.permute.xlu0 %1109
        %1111 = vrot.lane.b32.xlu0 %v1037, 20
        %v1112 = vpop.permute.xlu0 %1111
        %1113 = vrot.lane.b32.xlu0 %v1038, 20
        %v1114 = vpop.permute.xlu0 %1113
        %1115 = vrot.lane.b32.xlu0 %v1039, 20
        %v1116 = vpop.permute.xlu0 %1115
        %1117 = vrot.lane.b32.xlu0 %v1040, 20
        %v1118 = vpop.permute.xlu0 %1117
        %1119 = vrot.lane.b32.xlu0 %v1041, 20
        %v1120 = vpop.permute.xlu0 %1119
        %1121 = vrot.lane.b32.xlu0 %v1042, 20
        %v1122 = vpop.permute.xlu0 %1121
        %1123 = vrot.lane.b32.xlu0 %v1043, 20
        %v1124 = vpop.permute.xlu0 %1123
        %1125 = vrot.lane.b32.xlu0 %v1044, 20
        %v1126 = vpop.permute.xlu0 %1125
        %1127 = vrot.lane.b32.xlu0 %v1045, 20
        %v1128 = vpop.permute.xlu0 %1127
        %1129 = vrot.lane.b32.xlu0 %v1046, 20
        %v1130 = vpop.permute.xlu0 %1129
        %1131 = vrot.lane.b32.xlu0 %v1047, 20
        %v1132 = vpop.permute.xlu0 %1131
        %1133 = vrot.lane.b32.xlu0 %v1048, 20
        %v1134 = vpop.permute.xlu0 %1133
        %1135 = vrot.lane.b32.xlu0 %v1049, 20
        %v1136 = vpop.permute.xlu0 %1135
        %1137 = vrot.lane.b32.xlu0 %v1050, 20
        %v1138 = vpop.permute.xlu0 %1137
        %1139 = vrot.lane.b32.xlu0 %v1051, 20
        %v1140 = vpop.permute.xlu0 %1139
        %1141 = vrot.lane.b32.xlu0 %v1052, 20
        %v1142 = vpop.permute.xlu0 %1141
        %1143 = vrot.lane.b32.xlu0 %v1053, 20
        %v1144 = vpop.permute.xlu0 %1143
        %1145 = vrot.lane.b32.xlu0 %v1054, 20
        %v1146 = vpop.permute.xlu0 %1145
        %1147 = vrot.lane.b32.xlu0 %v1055, 20
        %v1148 = vpop.permute.xlu0 %1147
        %1149 = vrot.lane.b32.xlu0 %v1056, 20
        %v1150 = vpop.permute.xlu0 %1149
        %1151 = vrot.lane.b32.xlu0 %v1057, 20
        %v1152 = vpop.permute.xlu0 %1151
        %1153 = vrot.lane.b32.xlu0 %v1058, 20
        %v1154 = vpop.permute.xlu0 %1153
        %vm1187 = vcmask 195744
        %1188 = vst.msk [vmem:[#allocation2] sm:$0xff] %vm1187, %v1092
        %1189 = vst.msk [vmem:[#allocation2 + $0x8] sm:$0xff] %vm1187, %v1094
        %1190 = vst.msk [vmem:[#allocation2 + $0x10] sm:$0xff] %vm1187, %v1096
        %1191 = vst.msk [vmem:[#allocation2 + $0x18] sm:$0xff] %vm1187, %v1098
        %1192 = vst.msk [vmem:[#allocation2 + $0x20] sm:$0xff] %vm1187, %v1100
        %1193 = vst.msk [vmem:[#allocation2 + $0x28] sm:$0xff] %vm1187, %v1102
        %1194 = vst.msk [vmem:[#allocation2 + $0x30] sm:$0xff] %vm1187, %v1104
        %1195 = vst.msk [vmem:[#allocation2 + $0x38] sm:$0xff] %vm1187, %v1106
        %1196 = vst.msk [vmem:[#allocation2 + $0x40] sm:$0xff] %vm1187, %v1108
        %1197 = vst.msk [vmem:[#allocation2 + $0x48] sm:$0xff] %vm1187, %v1110
        %1198 = vst.msk [vmem:[#allocation2 + $0x50] sm:$0xff] %vm1187, %v1112
        %1199 = vst.msk [vmem:[#allocation2 + $0x58] sm:$0xff] %vm1187, %v1114
        %1200 = vst.msk [vmem:[#allocation2 + $0x60] sm:$0xff] %vm1187, %v1116
        %1201 = vst.msk [vmem:[#allocation2 + $0x68] sm:$0xff] %vm1187, %v1118
        %1202 = vst.msk [vmem:[#allocation2 + $0x70] sm:$0xff] %vm1187, %v1120
        %1203 = vst.msk [vmem:[#allocation2 + $0x78] sm:$0xff] %vm1187, %v1122
        %1204 = vst.msk [vmem:[#allocation2 + $0x80] sm:$0xff] %vm1187, %v1124
        %1205 = vst.msk [vmem:[#allocation2 + $0x88] sm:$0xff] %vm1187, %v1126
        %1206 = vst.msk [vmem:[#allocation2 + $0x90] sm:$0xff] %vm1187, %v1128
        %1207 = vst.msk [vmem:[#allocation2 + $0x98] sm:$0xff] %vm1187, %v1130
        %1208 = vst.msk [vmem:[#allocation2 + $0xa0] sm:$0xff] %vm1187, %v1132
        %1209 = vst.msk [vmem:[#allocation2 + $0xa8] sm:$0xff] %vm1187, %v1134
        %1210 = vst.msk [vmem:[#allocation2 + $0xb0] sm:$0xff] %vm1187, %v1136
        %1211 = vst.msk [vmem:[#allocation2 + $0xb8] sm:$0xff] %vm1187, %v1138
        %1212 = vst.msk [vmem:[#allocation2 + $0xc0] sm:$0xff] %vm1187, %v1140
        %1213 = vst.msk [vmem:[#allocation2 + $0xc8] sm:$0xff] %vm1187, %v1142
        %1214 = vst.msk [vmem:[#allocation2 + $0xd0] sm:$0xff] %vm1187, %v1144
        %1215 = vst.msk [vmem:[#allocation2 + $0xd8] sm:$0xff] %vm1187, %v1146
        %1216 = vst.msk [vmem:[#allocation2 + $0xe0] sm:$0xff] %vm1187, %v1148
        %1217 = vst.msk [vmem:[#allocation2 + $0xe8] sm:$0xff] %vm1187, %v1150
        %1218 = vst.msk [vmem:[#allocation2 + $0xf0] sm:$0xff] %vm1187, %v1152
        %1219 = vst.msk [vmem:[#allocation2 + $0xf8] sm:$0xff] %vm1187, %v1154
        %s1220 = sadd.s32 %s184, 2
        %s1221 = smul.u32 %s1220, 24
        %s1222 = scalar_lea.vmem %s182, %s1221
        %v1223 = vld [vmem:[%s1222] sm:$0xff]
        %v1224 = vld [vmem:[%s1222 + $0x8] sm:$0xff]
        %v1225 = vld [vmem:[%s1222 + $0x18] sm:$0xff]
        %v1226 = vld [vmem:[%s1222 + $0x20] sm:$0xff]
        %v1227 = vld [vmem:[%s1222 + $0x30] sm:$0xff]
        %v1228 = vld [vmem:[%s1222 + $0x38] sm:$0xff]
        %v1229 = vld [vmem:[%s1222 + $0x48] sm:$0xff]
        %v1230 = vld [vmem:[%s1222 + $0x50] sm:$0xff]
        %v1231 = vld [vmem:[%s1222 + $0x60] sm:$0xff]
        %v1232 = vld [vmem:[%s1222 + $0x68] sm:$0xff]
        %v1233 = vld [vmem:[%s1222 + $0x78] sm:$0xff]
        %v1234 = vld [vmem:[%s1222 + $0x80] sm:$0xff]
        %v1235 = vld [vmem:[%s1222 + $0x90] sm:$0xff]
        %v1236 = vld [vmem:[%s1222 + $0x98] sm:$0xff]
        %v1237 = vld [vmem:[%s1222 + $0xa8] sm:$0xff]
        %v1238 = vld [vmem:[%s1222 + $0xb0] sm:$0xff]
        %v1239 = vld [vmem:[%s1222 + $0xc0] sm:$0xff]
        %v1240 = vld [vmem:[%s1222 + $0xc8] sm:$0xff]
        %v1241 = vld [vmem:[%s1222 + $0xd8] sm:$0xff]
        %v1242 = vld [vmem:[%s1222 + $0xe0] sm:$0xff]
        %v1243 = vld [vmem:[%s1222 + $0xf0] sm:$0xff]
        %v1244 = vld [vmem:[%s1222 + $0xf8] sm:$0xff]
        %v1245 = vld [vmem:[%s1222 + $0x108] sm:$0xff]
        %v1246 = vld [vmem:[%s1222 + $0x110] sm:$0xff]
        %v1247 = vld [vmem:[%s1222 + $0x120] sm:$0xff]
        %v1248 = vld [vmem:[%s1222 + $0x128] sm:$0xff]
        %v1249 = vld [vmem:[%s1222 + $0x138] sm:$0xff]
        %v1250 = vld [vmem:[%s1222 + $0x140] sm:$0xff]
        %v1251 = vld [vmem:[%s1222 + $0x150] sm:$0xff]
        %v1252 = vld [vmem:[%s1222 + $0x158] sm:$0xff]
        %v1253 = vld [vmem:[%s1222 + $0x168] sm:$0xff]
        %v1254 = vld [vmem:[%s1222 + $0x170] sm:$0xff]
        %1287 = vrot.lane.b32.xlu0 %v1223, 24
        %v1288 = vpop.permute.xlu0 %1287
        %1289 = vrot.lane.b32.xlu0 %v1224, 24
        %v1290 = vpop.permute.xlu0 %1289
        %1291 = vrot.lane.b32.xlu0 %v1225, 24
        %v1292 = vpop.permute.xlu0 %1291
        %1293 = vrot.lane.b32.xlu0 %v1226, 24
        %v1294 = vpop.permute.xlu0 %1293
        %1295 = vrot.lane.b32.xlu0 %v1227, 24
        %v1296 = vpop.permute.xlu0 %1295
        %1297 = vrot.lane.b32.xlu0 %v1228, 24
        %v1298 = vpop.permute.xlu0 %1297
        %1299 = vrot.lane.b32.xlu0 %v1229, 24
        %v1300 = vpop.permute.xlu0 %1299
        %1301 = vrot.lane.b32.xlu0 %v1230, 24
        %v1302 = vpop.permute.xlu0 %1301
        %1303 = vrot.lane.b32.xlu0 %v1231, 24
        %v1304 = vpop.permute.xlu0 %1303
        %1305 = vrot.lane.b32.xlu0 %v1232, 24
        %v1306 = vpop.permute.xlu0 %1305
        %1307 = vrot.lane.b32.xlu0 %v1233, 24
        %v1308 = vpop.permute.xlu0 %1307
        %1309 = vrot.lane.b32.xlu0 %v1234, 24
        %v1310 = vpop.permute.xlu0 %1309
        %1311 = vrot.lane.b32.xlu0 %v1235, 24
        %v1312 = vpop.permute.xlu0 %1311
        %1313 = vrot.lane.b32.xlu0 %v1236, 24
        %v1314 = vpop.permute.xlu0 %1313
        %1315 = vrot.lane.b32.xlu0 %v1237, 24
        %v1316 = vpop.permute.xlu0 %1315
        %1317 = vrot.lane.b32.xlu0 %v1238, 24
        %v1318 = vpop.permute.xlu0 %1317
        %1319 = vrot.lane.b32.xlu0 %v1239, 24
        %v1320 = vpop.permute.xlu0 %1319
        %1321 = vrot.lane.b32.xlu0 %v1240, 24
        %v1322 = vpop.permute.xlu0 %1321
        %1323 = vrot.lane.b32.xlu0 %v1241, 24
        %v1324 = vpop.permute.xlu0 %1323
        %1325 = vrot.lane.b32.xlu0 %v1242, 24
        %v1326 = vpop.permute.xlu0 %1325
        %1327 = vrot.lane.b32.xlu0 %v1243, 24
        %v1328 = vpop.permute.xlu0 %1327
        %1329 = vrot.lane.b32.xlu0 %v1244, 24
        %v1330 = vpop.permute.xlu0 %1329
        %1331 = vrot.lane.b32.xlu0 %v1245, 24
        %v1332 = vpop.permute.xlu0 %1331
        %1333 = vrot.lane.b32.xlu0 %v1246, 24
        %v1334 = vpop.permute.xlu0 %1333
        %1335 = vrot.lane.b32.xlu0 %v1247, 24
        %v1336 = vpop.permute.xlu0 %1335
        %1337 = vrot.lane.b32.xlu0 %v1248, 24
        %v1338 = vpop.permute.xlu0 %1337
        %1339 = vrot.lane.b32.xlu0 %v1249, 24
        %v1340 = vpop.permute.xlu0 %1339
        %1341 = vrot.lane.b32.xlu0 %v1250, 24
        %v1342 = vpop.permute.xlu0 %1341
        %1343 = vrot.lane.b32.xlu0 %v1251, 24
        %v1344 = vpop.permute.xlu0 %1343
        %1345 = vrot.lane.b32.xlu0 %v1252, 24
        %v1346 = vpop.permute.xlu0 %1345
        %1347 = vrot.lane.b32.xlu0 %v1253, 24
        %v1348 = vpop.permute.xlu0 %1347
        %1349 = vrot.lane.b32.xlu0 %v1254, 24
        %v1350 = vpop.permute.xlu0 %1349
        %vm1383 = vcmask 228544
        %1384 = vst.msk [vmem:[#allocation2] sm:$0xff] %vm1383, %v1288
        %1385 = vst.msk [vmem:[#allocation2 + $0x8] sm:$0xff] %vm1383, %v1290
        %1386 = vst.msk [vmem:[#allocation2 + $0x10] sm:$0xff] %vm1383, %v1292
        %1387 = vst.msk [vmem:[#allocation2 + $0x18] sm:$0xff] %vm1383, %v1294
        %1388 = vst.msk [vmem:[#allocation2 + $0x20] sm:$0xff] %vm1383, %v1296
        %1389 = vst.msk [vmem:[#allocation2 + $0x28] sm:$0xff] %vm1383, %v1298
        %1390 = vst.msk [vmem:[#allocation2 + $0x30] sm:$0xff] %vm1383, %v1300
        %1391 = vst.msk [vmem:[#allocation2 + $0x38] sm:$0xff] %vm1383, %v1302
        %1392 = vst.msk [vmem:[#allocation2 + $0x40] sm:$0xff] %vm1383, %v1304
        %1393 = vst.msk [vmem:[#allocation2 + $0x48] sm:$0xff] %vm1383, %v1306
        %1394 = vst.msk [vmem:[#allocation2 + $0x50] sm:$0xff] %vm1383, %v1308
        %1395 = vst.msk [vmem:[#allocation2 + $0x58] sm:$0xff] %vm1383, %v1310
        %1396 = vst.msk [vmem:[#allocation2 + $0x60] sm:$0xff] %vm1383, %v1312
        %1397 = vst.msk [vmem:[#allocation2 + $0x68] sm:$0xff] %vm1383, %v1314
        %1398 = vst.msk [vmem:[#allocation2 + $0x70] sm:$0xff] %vm1383, %v1316
        %1399 = vst.msk [vmem:[#allocation2 + $0x78] sm:$0xff] %vm1383, %v1318
        %1400 = vst.msk [vmem:[#allocation2 + $0x80] sm:$0xff] %vm1383, %v1320
        %1401 = vst.msk [vmem:[#allocation2 + $0x88] sm:$0xff] %vm1383, %v1322
        %1402 = vst.msk [vmem:[#allocation2 + $0x90] sm:$0xff] %vm1383, %v1324
        %1403 = vst.msk [vmem:[#allocation2 + $0x98] sm:$0xff] %vm1383, %v1326
        %1404 = vst.msk [vmem:[#allocation2 + $0xa0] sm:$0xff] %vm1383, %v1328
        %1405 = vst.msk [vmem:[#allocation2 + $0xa8] sm:$0xff] %vm1383, %v1330
        %1406 = vst.msk [vmem:[#allocation2 + $0xb0] sm:$0xff] %vm1383, %v1332
        %1407 = vst.msk [vmem:[#allocation2 + $0xb8] sm:$0xff] %vm1383, %v1334
        %1408 = vst.msk [vmem:[#allocation2 + $0xc0] sm:$0xff] %vm1383, %v1336
        %1409 = vst.msk [vmem:[#allocation2 + $0xc8] sm:$0xff] %vm1383, %v1338
        %1410 = vst.msk [vmem:[#allocation2 + $0xd0] sm:$0xff] %vm1383, %v1340
        %1411 = vst.msk [vmem:[#allocation2 + $0xd8] sm:$0xff] %vm1383, %v1342
        %1412 = vst.msk [vmem:[#allocation2 + $0xe0] sm:$0xff] %vm1383, %v1344
        %1413 = vst.msk [vmem:[#allocation2 + $0xe8] sm:$0xff] %vm1383, %v1346
        %1414 = vst.msk [vmem:[#allocation2 + $0xf0] sm:$0xff] %vm1383, %v1348
        %1415 = vst.msk [vmem:[#allocation2 + $0xf8] sm:$0xff] %vm1383, %v1350
        %v1416 = vld [vmem:[%s1222 + $0x1] sm:$0xff]
        %v1417 = vld [vmem:[%s1222 + $0x9] sm:$0xff]
        %v1418 = vld [vmem:[%s1222 + $0x19] sm:$0xff]
        %v1419 = vld [vmem:[%s1222 + $0x21] sm:$0xff]
        %v1420 = vld [vmem:[%s1222 + $0x31] sm:$0xff]
        %v1421 = vld [vmem:[%s1222 + $0x39] sm:$0xff]
        %v1422 = vld [vmem:[%s1222 + $0x49] sm:$0xff]
        %v1423 = vld [vmem:[%s1222 + $0x51] sm:$0xff]
        %v1424 = vld [vmem:[%s1222 + $0x61] sm:$0xff]
        %v1425 = vld [vmem:[%s1222 + $0x69] sm:$0xff]
        %v1426 = vld [vmem:[%s1222 + $0x79] sm:$0xff]
        %v1427 = vld [vmem:[%s1222 + $0x81] sm:$0xff]
        %v1428 = vld [vmem:[%s1222 + $0x91] sm:$0xff]
        %v1429 = vld [vmem:[%s1222 + $0x99] sm:$0xff]
        %v1430 = vld [vmem:[%s1222 + $0xa9] sm:$0xff]
        %v1431 = vld [vmem:[%s1222 + $0xb1] sm:$0xff]
        %v1432 = vld [vmem:[%s1222 + $0xc1] sm:$0xff]
        %v1433 = vld [vmem:[%s1222 + $0xc9] sm:$0xff]
        %v1434 = vld [vmem:[%s1222 + $0xd9] sm:$0xff]
        %v1435 = vld [vmem:[%s1222 + $0xe1] sm:$0xff]
        %v1436 = vld [vmem:[%s1222 + $0xf1] sm:$0xff]
        %v1437 = vld [vmem:[%s1222 + $0xf9] sm:$0xff]
        %v1438 = vld [vmem:[%s1222 + $0x109] sm:$0xff]
        %v1439 = vld [vmem:[%s1222 + $0x111] sm:$0xff]
        %v1440 = vld [vmem:[%s1222 + $0x121] sm:$0xff]
        %v1441 = vld [vmem:[%s1222 + $0x129] sm:$0xff]
        %v1442 = vld [vmem:[%s1222 + $0x139] sm:$0xff]
        %v1443 = vld [vmem:[%s1222 + $0x141] sm:$0xff]
        %v1444 = vld [vmem:[%s1222 + $0x151] sm:$0xff]
        %v1445 = vld [vmem:[%s1222 + $0x159] sm:$0xff]
        %v1446 = vld [vmem:[%s1222 + $0x169] sm:$0xff]
        %v1447 = vld [vmem:[%s1222 + $0x171] sm:$0xff]
        %1480 = vrot.lane.b32.xlu0 %v1416, 28
        %v1481 = vpop.permute.xlu0 %1480
        %1482 = vrot.lane.b32.xlu0 %v1417, 28
        %v1483 = vpop.permute.xlu0 %1482
        %1484 = vrot.lane.b32.xlu0 %v1418, 28
        %v1485 = vpop.permute.xlu0 %1484
        %1486 = vrot.lane.b32.xlu0 %v1419, 28
        %v1487 = vpop.permute.xlu0 %1486
        %1488 = vrot.lane.b32.xlu0 %v1420, 28
        %v1489 = vpop.permute.xlu0 %1488
        %1490 = vrot.lane.b32.xlu0 %v1421, 28
        %v1491 = vpop.permute.xlu0 %1490
        %1492 = vrot.lane.b32.xlu0 %v1422, 28
        %v1493 = vpop.permute.xlu0 %1492
        %1494 = vrot.lane.b32.xlu0 %v1423, 28
        %v1495 = vpop.permute.xlu0 %1494
        %1496 = vrot.lane.b32.xlu0 %v1424, 28
        %v1497 = vpop.permute.xlu0 %1496
        %1498 = vrot.lane.b32.xlu0 %v1425, 28
        %v1499 = vpop.permute.xlu0 %1498
        %1500 = vrot.lane.b32.xlu0 %v1426, 28
        %v1501 = vpop.permute.xlu0 %1500
        %1502 = vrot.lane.b32.xlu0 %v1427, 28
        %v1503 = vpop.permute.xlu0 %1502
        %1504 = vrot.lane.b32.xlu0 %v1428, 28
        %v1505 = vpop.permute.xlu0 %1504
        %1506 = vrot.lane.b32.xlu0 %v1429, 28
        %v1507 = vpop.permute.xlu0 %1506
        %1508 = vrot.lane.b32.xlu0 %v1430, 28
        %v1509 = vpop.permute.xlu0 %1508
        %1510 = vrot.lane.b32.xlu0 %v1431, 28
        %v1511 = vpop.permute.xlu0 %1510
        %1512 = vrot.lane.b32.xlu0 %v1432, 28
        %v1513 = vpop.permute.xlu0 %1512
        %1514 = vrot.lane.b32.xlu0 %v1433, 28
        %v1515 = vpop.permute.xlu0 %1514
        %1516 = vrot.lane.b32.xlu0 %v1434, 28
        %v1517 = vpop.permute.xlu0 %1516
        %1518 = vrot.lane.b32.xlu0 %v1435, 28
        %v1519 = vpop.permute.xlu0 %1518
        %1520 = vrot.lane.b32.xlu0 %v1436, 28
        %v1521 = vpop.permute.xlu0 %1520
        %1522 = vrot.lane.b32.xlu0 %v1437, 28
        %v1523 = vpop.permute.xlu0 %1522
        %1524 = vrot.lane.b32.xlu0 %v1438, 28
        %v1525 = vpop.permute.xlu0 %1524
        %1526 = vrot.lane.b32.xlu0 %v1439, 28
        %v1527 = vpop.permute.xlu0 %1526
        %1528 = vrot.lane.b32.xlu0 %v1440, 28
        %v1529 = vpop.permute.xlu0 %1528
        %1530 = vrot.lane.b32.xlu0 %v1441, 28
        %v1531 = vpop.permute.xlu0 %1530
        %1532 = vrot.lane.b32.xlu0 %v1442, 28
        %v1533 = vpop.permute.xlu0 %1532
        %1534 = vrot.lane.b32.xlu0 %v1443, 28
        %v1535 = vpop.permute.xlu0 %1534
        %1536 = vrot.lane.b32.xlu0 %v1444, 28
        %v1537 = vpop.permute.xlu0 %1536
        %1538 = vrot.lane.b32.xlu0 %v1445, 28
        %v1539 = vpop.permute.xlu0 %1538
        %1540 = vrot.lane.b32.xlu0 %v1446, 28
        %v1541 = vpop.permute.xlu0 %1540
        %1542 = vrot.lane.b32.xlu0 %v1447, 28
        %v1543 = vpop.permute.xlu0 %1542
        %vm1576 = vcmask 261344
        %1577 = vst.msk [vmem:[#allocation2] sm:$0xff] %vm1576, %v1481
        %1578 = vst.msk [vmem:[#allocation2 + $0x8] sm:$0xff] %vm1576, %v1483
        %1579 = vst.msk [vmem:[#allocation2 + $0x10] sm:$0xff] %vm1576, %v1485
        %1580 = vst.msk [vmem:[#allocation2 + $0x18] sm:$0xff] %vm1576, %v1487
        %1581 = vst.msk [vmem:[#allocation2 + $0x20] sm:$0xff] %vm1576, %v1489
        %1582 = vst.msk [vmem:[#allocation2 + $0x28] sm:$0xff] %vm1576, %v1491
        %1583 = vst.msk [vmem:[#allocation2 + $0x30] sm:$0xff] %vm1576, %v1493
        %1584 = vst.msk [vmem:[#allocation2 + $0x38] sm:$0xff] %vm1576, %v1495
        %1585 = vst.msk [vmem:[#allocation2 + $0x40] sm:$0xff] %vm1576, %v1497
        %1586 = vst.msk [vmem:[#allocation2 + $0x48] sm:$0xff] %vm1576, %v1499
        %1587 = vst.msk [vmem:[#allocation2 + $0x50] sm:$0xff] %vm1576, %v1501
        %1588 = vst.msk [vmem:[#allocation2 + $0x58] sm:$0xff] %vm1576, %v1503
        %1589 = vst.msk [vmem:[#allocation2 + $0x60] sm:$0xff] %vm1576, %v1505
        %1590 = vst.msk [vmem:[#allocation2 + $0x68] sm:$0xff] %vm1576, %v1507
        %1591 = vst.msk [vmem:[#allocation2 + $0x70] sm:$0xff] %vm1576, %v1509
        %1592 = vst.msk [vmem:[#allocation2 + $0x78] sm:$0xff] %vm1576, %v1511
        %1593 = vst.msk [vmem:[#allocation2 + $0x80] sm:$0xff] %vm1576, %v1513
        %1594 = vst.msk [vmem:[#allocation2 + $0x88] sm:$0xff] %vm1576, %v1515
        %1595 = vst.msk [vmem:[#allocation2 + $0x90] sm:$0xff] %vm1576, %v1517
        %1596 = vst.msk [vmem:[#allocation2 + $0x98] sm:$0xff] %vm1576, %v1519
        %1597 = vst.msk [vmem:[#allocation2 + $0xa0] sm:$0xff] %vm1576, %v1521
        %1598 = vst.msk [vmem:[#allocation2 + $0xa8] sm:$0xff] %vm1576, %v1523
        %1599 = vst.msk [vmem:[#allocation2 + $0xb0] sm:$0xff] %vm1576, %v1525
        %1600 = vst.msk [vmem:[#allocation2 + $0xb8] sm:$0xff] %vm1576, %v1527
        %1601 = vst.msk [vmem:[#allocation2 + $0xc0] sm:$0xff] %vm1576, %v1529
        %1602 = vst.msk [vmem:[#allocation2 + $0xc8] sm:$0xff] %vm1576, %v1531
        %1603 = vst.msk [vmem:[#allocation2 + $0xd0] sm:$0xff] %vm1576, %v1533
        %1604 = vst.msk [vmem:[#allocation2 + $0xd8] sm:$0xff] %vm1576, %v1535
        %1605 = vst.msk [vmem:[#allocation2 + $0xe0] sm:$0xff] %vm1576, %v1537
        %1606 = vst.msk [vmem:[#allocation2 + $0xe8] sm:$0xff] %vm1576, %v1539
        %1607 = vst.msk [vmem:[#allocation2 + $0xf0] sm:$0xff] %vm1576, %v1541
        %1608 = vst.msk [vmem:[#allocation2 + $0xf8] sm:$0xff] %vm1576, %v1543
        %v1609 = vld [vmem:[%s1222 + $0x2] sm:$0xff]
        %v1610 = vld [vmem:[%s1222 + $0xa] sm:$0xff]
        %v1611 = vld [vmem:[%s1222 + $0x1a] sm:$0xff]
        %v1612 = vld [vmem:[%s1222 + $0x22] sm:$0xff]
        %v1613 = vld [vmem:[%s1222 + $0x32] sm:$0xff]
        %v1614 = vld [vmem:[%s1222 + $0x3a] sm:$0xff]
        %v1615 = vld [vmem:[%s1222 + $0x4a] sm:$0xff]
        %v1616 = vld [vmem:[%s1222 + $0x52] sm:$0xff]
        %v1617 = vld [vmem:[%s1222 + $0x62] sm:$0xff]
        %v1618 = vld [vmem:[%s1222 + $0x6a] sm:$0xff]
        %v1619 = vld [vmem:[%s1222 + $0x7a] sm:$0xff]
        %v1620 = vld [vmem:[%s1222 + $0x82] sm:$0xff]
        %v1621 = vld [vmem:[%s1222 + $0x92] sm:$0xff]
        %v1622 = vld [vmem:[%s1222 + $0x9a] sm:$0xff]
        %v1623 = vld [vmem:[%s1222 + $0xaa] sm:$0xff]
        %v1624 = vld [vmem:[%s1222 + $0xb2] sm:$0xff]
        %v1625 = vld [vmem:[%s1222 + $0xc2] sm:$0xff]
        %v1626 = vld [vmem:[%s1222 + $0xca] sm:$0xff]
        %v1627 = vld [vmem:[%s1222 + $0xda] sm:$0xff]
        %v1628 = vld [vmem:[%s1222 + $0xe2] sm:$0xff]
        %v1629 = vld [vmem:[%s1222 + $0xf2] sm:$0xff]
        %v1630 = vld [vmem:[%s1222 + $0xfa] sm:$0xff]
        %v1631 = vld [vmem:[%s1222 + $0x10a] sm:$0xff]
        %v1632 = vld [vmem:[%s1222 + $0x112] sm:$0xff]
        %v1633 = vld [vmem:[%s1222 + $0x122] sm:$0xff]
        %v1634 = vld [vmem:[%s1222 + $0x12a] sm:$0xff]
        %v1635 = vld [vmem:[%s1222 + $0x13a] sm:$0xff]
        %v1636 = vld [vmem:[%s1222 + $0x142] sm:$0xff]
        %v1637 = vld [vmem:[%s1222 + $0x152] sm:$0xff]
        %v1638 = vld [vmem:[%s1222 + $0x15a] sm:$0xff]
        %v1639 = vld [vmem:[%s1222 + $0x16a] sm:$0xff]
        %v1640 = vld [vmem:[%s1222 + $0x172] sm:$0xff]
        %1673 = vrot.lane.b32.xlu0 %v1609, 32
        %v1674 = vpop.permute.xlu0 %1673
        %1675 = vrot.lane.b32.xlu0 %v1610, 32
        %v1676 = vpop.permute.xlu0 %1675
        %1677 = vrot.lane.b32.xlu0 %v1611, 32
        %v1678 = vpop.permute.xlu0 %1677
        %1679 = vrot.lane.b32.xlu0 %v1612, 32
        %v1680 = vpop.permute.xlu0 %1679
        %1681 = vrot.lane.b32.xlu0 %v1613, 32
        %v1682 = vpop.permute.xlu0 %1681
        %1683 = vrot.lane.b32.xlu0 %v1614, 32
        %v1684 = vpop.permute.xlu0 %1683
        %1685 = vrot.lane.b32.xlu0 %v1615, 32
        %v1686 = vpop.permute.xlu0 %1685
        %1687 = vrot.lane.b32.xlu0 %v1616, 32
        %v1688 = vpop.permute.xlu0 %1687
        %1689 = vrot.lane.b32.xlu0 %v1617, 32
        %v1690 = vpop.permute.xlu0 %1689
        %1691 = vrot.lane.b32.xlu0 %v1618, 32
        %v1692 = vpop.permute.xlu0 %1691
        %1693 = vrot.lane.b32.xlu0 %v1619, 32
        %v1694 = vpop.permute.xlu0 %1693
        %1695 = vrot.lane.b32.xlu0 %v1620, 32
        %v1696 = vpop.permute.xlu0 %1695
        %1697 = vrot.lane.b32.xlu0 %v1621, 32
        %v1698 = vpop.permute.xlu0 %1697
        %1699 = vrot.lane.b32.xlu0 %v1622, 32
        %v1700 = vpop.permute.xlu0 %1699
        %1701 = vrot.lane.b32.xlu0 %v1623, 32
        %v1702 = vpop.permute.xlu0 %1701
        %1703 = vrot.lane.b32.xlu0 %v1624, 32
        %v1704 = vpop.permute.xlu0 %1703
        %1705 = vrot.lane.b32.xlu0 %v1625, 32
        %v1706 = vpop.permute.xlu0 %1705
        %1707 = vrot.lane.b32.xlu0 %v1626, 32
        %v1708 = vpop.permute.xlu0 %1707
        %1709 = vrot.lane.b32.xlu0 %v1627, 32
        %v1710 = vpop.permute.xlu0 %1709
        %1711 = vrot.lane.b32.xlu0 %v1628, 32
        %v1712 = vpop.permute.xlu0 %1711
        %1713 = vrot.lane.b32.xlu0 %v1629, 32
        %v1714 = vpop.permute.xlu0 %1713
        %1715 = vrot.lane.b32.xlu0 %v1630, 32
        %v1716 = vpop.permute.xlu0 %1715
        %1717 = vrot.lane.b32.xlu0 %v1631, 32
        %v1718 = vpop.permute.xlu0 %1717
        %1719 = vrot.lane.b32.xlu0 %v1632, 32
        %v1720 = vpop.permute.xlu0 %1719
        %1721 = vrot.lane.b32.xlu0 %v1633, 32
        %v1722 = vpop.permute.xlu0 %1721
        %1723 = vrot.lane.b32.xlu0 %v1634, 32
        %v1724 = vpop.permute.xlu0 %1723
        %1725 = vrot.lane.b32.xlu0 %v1635, 32
        %v1726 = vpop.permute.xlu0 %1725
        %1727 = vrot.lane.b32.xlu0 %v1636, 32
        %v1728 = vpop.permute.xlu0 %1727
        %1729 = vrot.lane.b32.xlu0 %v1637, 32
        %v1730 = vpop.permute.xlu0 %1729
        %1731 = vrot.lane.b32.xlu0 %v1638, 32
        %v1732 = vpop.permute.xlu0 %1731
        %1733 = vrot.lane.b32.xlu0 %v1639, 32
        %v1734 = vpop.permute.xlu0 %1733
        %1735 = vrot.lane.b32.xlu0 %v1640, 32
        %v1736 = vpop.permute.xlu0 %1735
        %vm1769 = vcmask 294144
        %1770 = vst.msk [vmem:[#allocation2] sm:$0xff] %vm1769, %v1674
        %1771 = vst.msk [vmem:[#allocation2 + $0x8] sm:$0xff] %vm1769, %v1676
        %1772 = vst.msk [vmem:[#allocation2 + $0x10] sm:$0xff] %vm1769, %v1678
        %1773 = vst.msk [vmem:[#allocation2 + $0x18] sm:$0xff] %vm1769, %v1680
        %1774 = vst.msk [vmem:[#allocation2 + $0x20] sm:$0xff] %vm1769, %v1682
        %1775 = vst.msk [vmem:[#allocation2 + $0x28] sm:$0xff] %vm1769, %v1684
        %1776 = vst.msk [vmem:[#allocation2 + $0x30] sm:$0xff] %vm1769, %v1686
        %1777 = vst.msk [vmem:[#allocation2 + $0x38] sm:$0xff] %vm1769, %v1688
        %1778 = vst.msk [vmem:[#allocation2 + $0x40] sm:$0xff] %vm1769, %v1690
        %1779 = vst.msk [vmem:[#allocation2 + $0x48] sm:$0xff] %vm1769, %v1692
        %1780 = vst.msk [vmem:[#allocation2 + $0x50] sm:$0xff] %vm1769, %v1694
        %1781 = vst.msk [vmem:[#allocation2 + $0x58] sm:$0xff] %vm1769, %v1696
        %1782 = vst.msk [vmem:[#allocation2 + $0x60] sm:$0xff] %vm1769, %v1698
        %1783 = vst.msk [vmem:[#allocation2 + $0x68] sm:$0xff] %vm1769, %v1700
        %1784 = vst.msk [vmem:[#allocation2 + $0x70] sm:$0xff] %vm1769, %v1702
        %1785 = vst.msk [vmem:[#allocation2 + $0x78] sm:$0xff] %vm1769, %v1704
        %1786 = vst.msk [vmem:[#allocation2 + $0x80] sm:$0xff] %vm1769, %v1706
        %1787 = vst.msk [vmem:[#allocation2 + $0x88] sm:$0xff] %vm1769, %v1708
        %1788 = vst.msk [vmem:[#allocation2 + $0x90] sm:$0xff] %vm1769, %v1710
        %1789 = vst.msk [vmem:[#allocation2 + $0x98] sm:$0xff] %vm1769, %v1712
        %1790 = vst.msk [vmem:[#allocation2 + $0xa0] sm:$0xff] %vm1769, %v1714
        %1791 = vst.msk [vmem:[#allocation2 + $0xa8] sm:$0xff] %vm1769, %v1716
        %1792 = vst.msk [vmem:[#allocation2 + $0xb0] sm:$0xff] %vm1769, %v1718
        %1793 = vst.msk [vmem:[#allocation2 + $0xb8] sm:$0xff] %vm1769, %v1720
        %1794 = vst.msk [vmem:[#allocation2 + $0xc0] sm:$0xff] %vm1769, %v1722
        %1795 = vst.msk [vmem:[#allocation2 + $0xc8] sm:$0xff] %vm1769, %v1724
        %1796 = vst.msk [vmem:[#allocation2 + $0xd0] sm:$0xff] %vm1769, %v1726
        %1797 = vst.msk [vmem:[#allocation2 + $0xd8] sm:$0xff] %vm1769, %v1728
        %1798 = vst.msk [vmem:[#allocation2 + $0xe0] sm:$0xff] %vm1769, %v1730
        %1799 = vst.msk [vmem:[#allocation2 + $0xe8] sm:$0xff] %vm1769, %v1732
        %1800 = vst.msk [vmem:[#allocation2 + $0xf0] sm:$0xff] %vm1769, %v1734
        %1801 = vst.msk [vmem:[#allocation2 + $0xf8] sm:$0xff] %vm1769, %v1736
        %v1802 = vld [vmem:[#allocation2] sm:$0xff]
        %v1803 = vld [vmem:[#allocation2 + $0x8] sm:$0xff]
        %v1804 = vld [vmem:[#allocation2 + $0x10] sm:$0xff]
        %v1805 = vld [vmem:[#allocation2 + $0x18] sm:$0xff]
        %v1806 = vld [vmem:[#allocation2 + $0x20] sm:$0xff]
        %v1807 = vld [vmem:[#allocation2 + $0x28] sm:$0xff]
        %v1808 = vld [vmem:[#allocation2 + $0x30] sm:$0xff]
        %v1809 = vld [vmem:[#allocation2 + $0x38] sm:$0xff]
        %v1810 = vld [vmem:[#allocation2 + $0x40] sm:$0xff]
        %v1811 = vld [vmem:[#allocation2 + $0x48] sm:$0xff]
        %v1812 = vld [vmem:[#allocation2 + $0x50] sm:$0xff]
        %v1813 = vld [vmem:[#allocation2 + $0x58] sm:$0xff]
        %v1814 = vld [vmem:[#allocation2 + $0x60] sm:$0xff]
        %v1815 = vld [vmem:[#allocation2 + $0x68] sm:$0xff]
        %v1816 = vld [vmem:[#allocation2 + $0x70] sm:$0xff]
        %v1817 = vld [vmem:[#allocation2 + $0x78] sm:$0xff]
        %v1818 = vld [vmem:[#allocation2 + $0x80] sm:$0xff]
        %v1819 = vld [vmem:[#allocation2 + $0x88] sm:$0xff]
        %v1820 = vld [vmem:[#allocation2 + $0x90] sm:$0xff]
        %v1821 = vld [vmem:[#allocation2 + $0x98] sm:$0xff]
        %v1822 = vld [vmem:[#allocation2 + $0xa0] sm:$0xff]
        %v1823 = vld [vmem:[#allocation2 + $0xa8] sm:$0xff]
        %v1824 = vld [vmem:[#allocation2 + $0xb0] sm:$0xff]
        %v1825 = vld [vmem:[#allocation2 + $0xb8] sm:$0xff]
        %v1826 = vld [vmem:[#allocation2 + $0xc0] sm:$0xff]
        %v1827 = vld [vmem:[#allocation2 + $0xc8] sm:$0xff]
        %v1828 = vld [vmem:[#allocation2 + $0xd0] sm:$0xff]
        %v1829 = vld [vmem:[#allocation2 + $0xd8] sm:$0xff]
        %v1830 = vld [vmem:[#allocation2 + $0xe0] sm:$0xff]
        %v1831 = vld [vmem:[#allocation2 + $0xe8] sm:$0xff]
        %v1832 = vld [vmem:[#allocation2 + $0xf0] sm:$0xff]
        %v1833 = vld [vmem:[#allocation2 + $0xf8] sm:$0xff]
        %v1834 = vld [vmem:[%s1] sm:$0xff]
        %v1835 = vld [vmem:[%s1 + $0x8] sm:$0xff]
        %v1836 = vld [vmem:[%s1 + $0x10] sm:$0xff]
        %v1837 = vld [vmem:[%s1 + $0x18] sm:$0xff]
        %v1838 = vld [vmem:[%s1 + $0x20] sm:$0xf]
        %v1839 = vld [vmem:[%s2] sm:$0x1]
        %v1841 = vlaneseq
        %v1842 = vshrl.u32 %v1841, 7
        %v1843 = vsub.s32 0, %v1842
        %v1844 = vrot.slane %v1839, %v1843
        %vm1846 = vcmask 293888
        %v1848 = vsel %vm1846, %v1802, 0
        %v1851 = vsel %vm1846, %v1803, 0
        %v1854 = vsel %vm1846, %v1804, 0
        %v1857 = vsel %vm1846, %v1805, 0
        %v1860 = vsel %vm1846, %v1806, 0
        %v1863 = vsel %vm1846, %v1807, 0
        %v1866 = vsel %vm1846, %v1808, 0
        %v1869 = vsel %vm1846, %v1809, 0
        %v1872 = vsel %vm1846, %v1810, 0
        %v1875 = vsel %vm1846, %v1811, 0
        %v1878 = vsel %vm1846, %v1812, 0
        %v1881 = vsel %vm1846, %v1813, 0
        %v1884 = vsel %vm1846, %v1814, 0
        %v1887 = vsel %vm1846, %v1815, 0
        %v1890 = vsel %vm1846, %v1816, 0
        %v1893 = vsel %vm1846, %v1817, 0
        %v1896 = vsel %vm1846, %v1818, 0
        %v1899 = vsel %vm1846, %v1819, 0
        %v1902 = vsel %vm1846, %v1820, 0
        %v1905 = vsel %vm1846, %v1821, 0
        %v1908 = vsel %vm1846, %v1822, 0
        %v1911 = vsel %vm1846, %v1823, 0
        %v1914 = vsel %vm1846, %v1824, 0
        %v1917 = vsel %vm1846, %v1825, 0
        %v1920 = vsel %vm1846, %v1826, 0
        %v1923 = vsel %vm1846, %v1827, 0
        %v1926 = vsel %vm1846, %v1828, 0
        %v1929 = vsel %vm1846, %v1829, 0
        %v1932 = vsel %vm1846, %v1830, 0
        %v1935 = vsel %vm1846, %v1831, 0
        %v1938 = vsel %vm1846, %v1832, 0
        %v1941 = vsel %vm1846, %v1833, 0
        %vm1943 = vcmask 1043456
        %v1945 = vsel %vm1943, %v1838, 0
        %1947 = vmatprep.subr.mxu0 0.0
        %1948 = vmatpush1.msra.mxu0 0.0
        %1949 = vmatprep.subr.mxu0 0.0
        %1950 = vmatpush1.msra.mxu0 0.0
        %1951 = vmatprep.subr.mxu0 0.0
        %1952 = vmatpush1.msra.mxu0 0.0
        %1953 = vmatprep.subr.mxu0 0.0
        %1954 = vmatpush1.msra.mxu0 0.0
        %1955 = vmatprep.subr.mxu0 0.0
        %1956 = vmatpush1.msra.mxu0 0.0
        %1957 = vmatprep.subr.mxu0 0.0
        %1958 = vmatpush1.msra.mxu0 0.0
        %1959 = vmatprep.subr.mxu0 0.0
        %1960 = vmatpush1.msra.mxu0 0.0
        %1961 = vmatprep.subr.mxu0 0.0
        %1962 = vmatpush1.msra.mxu0 0.0
        %1963 = vmatprep.subr.mxu0 0.0
        %1964 = vmatpush1.msra.mxu0 0.0
        %1965 = vmatprep.subr.mxu0 0.0
        %1966 = vmatpush1.msra.mxu0 0.0
        %1967 = vmatprep.subr.mxu0 0.0
        %1968 = vmatpush1.msra.mxu0 0.0
        %1969 = vmatprep.subr.mxu0 0.0
        %1970 = vmatpush1.msra.mxu0 %v1945
        %1971 = vmatprep.subr.mxu0 0.0
        %1972 = vmatpush1.msra.mxu0 %v1837
        %1973 = vmatprep.subr.mxu0 0.0
        %1974 = vmatpush1.msra.mxu0 %v1836
        %1975 = vmatprep.subr.mxu0 0.0
        %1976 = vmatpush1.msra.mxu0 %v1835
        %1977 = vmatprep.subr.mxu0 0.0
        %1978 = vmatpush1.msra.mxu0 %v1834
        %1979 = vmatprep.subr.mxu0 0.0
        %1980 = vmatpush2.msra.mxu0 0.0
        %1981 = vmatprep.subr.mxu0 0.0
        %1982 = vmatpush2.msra.mxu0 0.0
        %1983 = vmatprep.subr.mxu0 0.0
        %1984 = vmatpush2.msra.mxu0 0.0
        %1985 = vmatprep.subr.mxu0 0.0
        %1986 = vmatpush2.msra.mxu0 0.0
        %1987 = vmatprep.subr.mxu0 0.0
        %1988 = vmatpush2.msra.mxu0 0.0
        %1989 = vmatprep.subr.mxu0 0.0
        %1990 = vmatpush2.msra.mxu0 0.0
        %1991 = vmatprep.subr.mxu0 0.0
        %1992 = vmatpush2.msra.mxu0 0.0
        %1993 = vmatprep.subr.mxu0 0.0
        %1994 = vmatpush2.msra.mxu0 0.0
        %1995 = vmatprep.subr.mxu0 0.0
        %1996 = vmatpush2.msra.mxu0 0.0
        %1997 = vmatprep.subr.mxu0 0.0
        %1998 = vmatpush2.msra.mxu0 0.0
        %1999 = vmatprep.subr.mxu0 0.0
        %2000 = vmatpush2.msra.mxu0 0.0
        %2001 = vmatprep.subr.mxu0 0.0
        %2002 = vmatpush2.msra.mxu0 0.0
        %2003 = vmatprep.subr.mxu0 0.0
        %2004 = vmatpush2.msra.mxu0 0.0
        %2005 = vmatprep.subr.mxu0 0.0
        %2006 = vmatpush2.msra.mxu0 0.0
        %2007 = vmatprep.subr.mxu0 0.0
        %2008 = vmatpush2.msra.mxu0 0.0
        %2009 = vmatprep.subr.mxu0 0.0
        %2010 = vmatpush2.msra.mxu0 0.0
        %2011 = vmatprep.mubr.f32.mxu0 0.0
        %2012 = vmatmul.mubr.f32.gmra.mxu0 %v1848
        %v2013 = vpop.f32.mrf.mxu0
        %v2014 = vadd.f32 %v1844, %v2013
        %v2015 = vpop.f32.mrf.mxu0
        %2016 = vmatprep.mubr.f32.mxu0 0.0
        %2017 = vmatmul.mubr.f32.gmra.mxu0 %v1851
        %v2018 = vpop.f32.mrf.mxu0
        %v2019 = vadd.f32 %v1844, %v2018
        %v2020 = vpop.f32.mrf.mxu0
        %2021 = vmatprep.mubr.f32.mxu0 0.0
        %2022 = vmatmul.mubr.f32.gmra.mxu0 %v1854
        %v2023 = vpop.f32.mrf.mxu0
        %v2024 = vadd.f32 %v1844, %v2023
        %v2025 = vpop.f32.mrf.mxu0
        %2026 = vmatprep.mubr.f32.mxu0 0.0
        %2027 = vmatmul.mubr.f32.gmra.mxu0 %v1857
        %v2028 = vpop.f32.mrf.mxu0
        %v2029 = vadd.f32 %v1844, %v2028
        %v2030 = vpop.f32.mrf.mxu0
        %2031 = vmatprep.mubr.f32.mxu0 0.0
        %2032 = vmatmul.mubr.f32.gmra.mxu0 %v1860
        %v2033 = vpop.f32.mrf.mxu0
        %v2034 = vadd.f32 %v1844, %v2033
        %v2035 = vpop.f32.mrf.mxu0
        %2036 = vmatprep.mubr.f32.mxu0 0.0
        %2037 = vmatmul.mubr.f32.gmra.mxu0 %v1863
        %v2038 = vpop.f32.mrf.mxu0
        %v2039 = vadd.f32 %v1844, %v2038
        %v2040 = vpop.f32.mrf.mxu0
        %2041 = vmatprep.mubr.f32.mxu0 0.0
        %2042 = vmatmul.mubr.f32.gmra.mxu0 %v1866
        %v2043 = vpop.f32.mrf.mxu0
        %v2044 = vadd.f32 %v1844, %v2043
        %v2045 = vpop.f32.mrf.mxu0
        %2046 = vmatprep.mubr.f32.mxu0 0.0
        %2047 = vmatmul.mubr.f32.gmra.mxu0 %v1869
        %v2048 = vpop.f32.mrf.mxu0
        %v2049 = vadd.f32 %v1844, %v2048
        %v2050 = vpop.f32.mrf.mxu0
        %2051 = vmatprep.mubr.f32.mxu0 0.0
        %2052 = vmatmul.mubr.f32.gmra.mxu0 %v1872
        %v2053 = vpop.f32.mrf.mxu0
        %v2054 = vadd.f32 %v1844, %v2053
        %v2055 = vpop.f32.mrf.mxu0
        %2056 = vmatprep.mubr.f32.mxu0 0.0
        %2057 = vmatmul.mubr.f32.gmra.mxu0 %v1875
        %v2058 = vpop.f32.mrf.mxu0
        %v2059 = vadd.f32 %v1844, %v2058
        %v2060 = vpop.f32.mrf.mxu0
        %2061 = vmatprep.mubr.f32.mxu0 0.0
        %2062 = vmatmul.mubr.f32.gmra.mxu0 %v1878
        %v2063 = vpop.f32.mrf.mxu0
        %v2064 = vadd.f32 %v1844, %v2063
        %v2065 = vpop.f32.mrf.mxu0
        %2066 = vmatprep.mubr.f32.mxu0 0.0
        %2067 = vmatmul.mubr.f32.gmra.mxu0 %v1881
        %v2068 = vpop.f32.mrf.mxu0
        %v2069 = vadd.f32 %v1844, %v2068
        %v2070 = vpop.f32.mrf.mxu0
        %2071 = vmatprep.mubr.f32.mxu0 0.0
        %2072 = vmatmul.mubr.f32.gmra.mxu0 %v1884
        %v2073 = vpop.f32.mrf.mxu0
        %v2074 = vadd.f32 %v1844, %v2073
        %v2075 = vpop.f32.mrf.mxu0
        %2076 = vmatprep.mubr.f32.mxu0 0.0
        %2077 = vmatmul.mubr.f32.gmra.mxu0 %v1887
        %v2078 = vpop.f32.mrf.mxu0
        %v2079 = vadd.f32 %v1844, %v2078
        %v2080 = vpop.f32.mrf.mxu0
        %2081 = vmatprep.mubr.f32.mxu0 0.0
        %2082 = vmatmul.mubr.f32.gmra.mxu0 %v1890
        %v2083 = vpop.f32.mrf.mxu0
        %v2084 = vadd.f32 %v1844, %v2083
        %v2085 = vpop.f32.mrf.mxu0
        %2086 = vmatprep.mubr.f32.mxu0 0.0
        %2087 = vmatmul.mubr.f32.gmra.mxu0 %v1893
        %v2088 = vpop.f32.mrf.mxu0
        %v2089 = vadd.f32 %v1844, %v2088
        %v2090 = vpop.f32.mrf.mxu0
        %2091 = vmatprep.mubr.f32.mxu0 0.0
        %2092 = vmatmul.mubr.f32.gmra.mxu0 %v1896
        %v2093 = vpop.f32.mrf.mxu0
        %v2094 = vadd.f32 %v1844, %v2093
        %v2095 = vpop.f32.mrf.mxu0
        %2096 = vmatprep.mubr.f32.mxu0 0.0
        %2097 = vmatmul.mubr.f32.gmra.mxu0 %v1899
        %v2098 = vpop.f32.mrf.mxu0
        %v2099 = vadd.f32 %v1844, %v2098
        %v2100 = vpop.f32.mrf.mxu0
        %2101 = vmatprep.mubr.f32.mxu0 0.0
        %2102 = vmatmul.mubr.f32.gmra.mxu0 %v1902
        %v2103 = vpop.f32.mrf.mxu0
        %v2104 = vadd.f32 %v1844, %v2103
        %v2105 = vpop.f32.mrf.mxu0
        %2106 = vmatprep.mubr.f32.mxu0 0.0
        %2107 = vmatmul.mubr.f32.gmra.mxu0 %v1905
        %v2108 = vpop.f32.mrf.mxu0
        %v2109 = vadd.f32 %v1844, %v2108
        %v2110 = vpop.f32.mrf.mxu0
        %2111 = vmatprep.mubr.f32.mxu0 0.0
        %2112 = vmatmul.mubr.f32.gmra.mxu0 %v1908
        %v2113 = vpop.f32.mrf.mxu0
        %v2114 = vadd.f32 %v1844, %v2113
        %v2115 = vpop.f32.mrf.mxu0
        %2116 = vmatprep.mubr.f32.mxu0 0.0
        %2117 = vmatmul.mubr.f32.gmra.mxu0 %v1911
        %v2118 = vpop.f32.mrf.mxu0
        %v2119 = vadd.f32 %v1844, %v2118
        %v2120 = vpop.f32.mrf.mxu0
        %2121 = vmatprep.mubr.f32.mxu0 0.0
        %2122 = vmatmul.mubr.f32.gmra.mxu0 %v1914
        %v2123 = vpop.f32.mrf.mxu0
        %v2124 = vadd.f32 %v1844, %v2123
        %v2125 = vpop.f32.mrf.mxu0
        %2126 = vmatprep.mubr.f32.mxu0 0.0
        %2127 = vmatmul.mubr.f32.gmra.mxu0 %v1917
        %v2128 = vpop.f32.mrf.mxu0
        %v2129 = vadd.f32 %v1844, %v2128
        %v2130 = vpop.f32.mrf.mxu0
        %2131 = vmatprep.mubr.f32.mxu0 0.0
        %2132 = vmatmul.mubr.f32.gmra.mxu0 %v1920
        %v2133 = vpop.f32.mrf.mxu0
        %v2134 = vadd.f32 %v1844, %v2133
        %v2135 = vpop.f32.mrf.mxu0
        %2136 = vmatprep.mubr.f32.mxu0 0.0
        %2137 = vmatmul.mubr.f32.gmra.mxu0 %v1923
        %v2138 = vpop.f32.mrf.mxu0
        %v2139 = vadd.f32 %v1844, %v2138
        %v2140 = vpop.f32.mrf.mxu0
        %2141 = vmatprep.mubr.f32.mxu0 0.0
        %2142 = vmatmul.mubr.f32.gmra.mxu0 %v1926
        %v2143 = vpop.f32.mrf.mxu0
        %v2144 = vadd.f32 %v1844, %v2143
        %v2145 = vpop.f32.mrf.mxu0
        %2146 = vmatprep.mubr.f32.mxu0 0.0
        %2147 = vmatmul.mubr.f32.gmra.mxu0 %v1929
        %v2148 = vpop.f32.mrf.mxu0
        %v2149 = vadd.f32 %v1844, %v2148
        %v2150 = vpop.f32.mrf.mxu0
        %2151 = vmatprep.mubr.f32.mxu0 0.0
        %2152 = vmatmul.mubr.f32.gmra.mxu0 %v1932
        %v2153 = vpop.f32.mrf.mxu0
        %v2154 = vadd.f32 %v1844, %v2153
        %v2155 = vpop.f32.mrf.mxu0
        %2156 = vmatprep.mubr.f32.mxu0 0.0
        %2157 = vmatmul.mubr.f32.gmra.mxu0 %v1935
        %v2158 = vpop.f32.mrf.mxu0
        %v2159 = vadd.f32 %v1844, %v2158
        %v2160 = vpop.f32.mrf.mxu0
        %2161 = vmatprep.mubr.f32.mxu0 0.0
        %2162 = vmatmul.mubr.f32.gmra.mxu0 %v1938
        %v2163 = vpop.f32.mrf.mxu0
        %v2164 = vadd.f32 %v1844, %v2163
        %v2165 = vpop.f32.mrf.mxu0
        %2166 = vmatprep.mubr.f32.mxu0 0.0
        %2167 = vmatmul.mubr.f32.gmra.mxu0 %v1941
        %v2168 = vpop.f32.mrf.mxu0
        %v2169 = vadd.f32 %v1844, %v2168
        %v2170 = vpop.f32.mrf.mxu0
        %2171 = vdwg.mxu0
        %2172 = vst [vmem:[%s177] sm:$0xff] %v2014
        %2173 = vst [vmem:[%s177 + $0x8] sm:$0xff] %v2019
        %2174 = vst [vmem:[%s177 + $0x10] sm:$0xff] %v2024
        %2175 = vst [vmem:[%s177 + $0x18] sm:$0xff] %v2029
        %2176 = vst [vmem:[%s177 + $0x20] sm:$0xff] %v2034
        %2177 = vst [vmem:[%s177 + $0x28] sm:$0xff] %v2039
        %2178 = vst [vmem:[%s177 + $0x30] sm:$0xff] %v2044
        %2179 = vst [vmem:[%s177 + $0x38] sm:$0xff] %v2049
        %2180 = vst [vmem:[%s177 + $0x40] sm:$0xff] %v2054
        %2181 = vst [vmem:[%s177 + $0x48] sm:$0xff] %v2059
        %2182 = vst [vmem:[%s177 + $0x50] sm:$0xff] %v2064
        %2183 = vst [vmem:[%s177 + $0x58] sm:$0xff] %v2069
        %2184 = vst [vmem:[%s177 + $0x60] sm:$0xff] %v2074
        %2185 = vst [vmem:[%s177 + $0x68] sm:$0xff] %v2079
        %2186 = vst [vmem:[%s177 + $0x70] sm:$0xff] %v2084
        %2187 = vst [vmem:[%s177 + $0x78] sm:$0xff] %v2089
        %2188 = vst [vmem:[%s177 + $0x80] sm:$0xff] %v2094
        %2189 = vst [vmem:[%s177 + $0x88] sm:$0xff] %v2099
        %2190 = vst [vmem:[%s177 + $0x90] sm:$0xff] %v2104
        %2191 = vst [vmem:[%s177 + $0x98] sm:$0xff] %v2109
        %2192 = vst [vmem:[%s177 + $0xa0] sm:$0xff] %v2114
        %2193 = vst [vmem:[%s177 + $0xa8] sm:$0xff] %v2119
        %2194 = vst [vmem:[%s177 + $0xb0] sm:$0xff] %v2124
        %2195 = vst [vmem:[%s177 + $0xb8] sm:$0xff] %v2129
        %2196 = vst [vmem:[%s177 + $0xc0] sm:$0xff] %v2134
        %2197 = vst [vmem:[%s177 + $0xc8] sm:$0xff] %v2139
        %2198 = vst [vmem:[%s177 + $0xd0] sm:$0xff] %v2144
        %2199 = vst [vmem:[%s177 + $0xd8] sm:$0xff] %v2149
        %2200 = vst [vmem:[%s177 + $0xe0] sm:$0xff] %v2154
        %2201 = vst [vmem:[%s177 + $0xe8] sm:$0xff] %v2159
        %2202 = vst [vmem:[%s177 + $0xf0] sm:$0xff] %v2164
        %2203 = vst [vmem:[%s177 + $0xf8] sm:$0xff] %v2169
        %s2204 = sand.u32 %s107, 1
        %s2205 = scalar_lea.sflag [#allocation4], %s2204
        %s2206 = sand.u32 %s107, 1
        %s2207 = smul.addr %s2206, 256
        %s2208 = scalar_lea.vmem [#allocation3], %s2207
        // Predicated region
        $region33: #{tpu_custom_call.1} parent=31 // pred_check
          %p2209 = pneg %p117
        $region34: #{tpu_custom_call.1} parent=31 // pred_check_branch
          %2211 = sbr.rel (%p2209) target = $region36
        $region35: #{tpu_custom_call.1} parent=31 // pred_region
          %s2212 = smul.u32 32, %s22
          %s2214 = ssub.s32 4096, 4096
          %2215 = vsyncadd %s2205, %s2214
          %s2216 = smul.addr %s21, 32
          %s2217 = sadd.s32 %s2212, %s2216
          %s2218 = smul.addr %s2217, 128
          %s2219 = scalar_lea.hbm %s3, %s2218
          %s2220 = sshll.u32 %s2208, 4
          %s2221 = int_to_ptr.vmem [resolvable:$true] %s2220
          %2226 = dma.vmem_to_hbm [thread:$0]  %s2221, 4096, %s2219, %s2205, 128, 128, 8
        $region36: #{tpu_custom_call.1} parent=31 // pred_fallthru
          _
      $region32: #{tpu_custom_call.1} parent=5 // pred_fallthru
        _
      %p2227 = scmp.le.s32.totalorder 2, %s12
      // Predicated region
      $region37: #{tpu_custom_call.1} parent=5 // pred_check
        %p2228 = pneg %p2227
      $region38: #{tpu_custom_call.1} parent=5 // pred_check_branch
        %2230 = sbr.rel (%p2228) target = $region40
      $region39: #{tpu_custom_call.1} parent=5 // pred_region
        %s2231 = ssub.s32 %s12, 2
        // Predicated region
        $region41: #{tpu_custom_call.1} parent=39 // pred_check
          %p2232 = pneg %p123
        $region42: #{tpu_custom_call.1} parent=39 // pred_check_branch
          %2234 = sbr.rel (%p2232) target = $region44
        $region43: #{tpu_custom_call.1} parent=39 // pred_region
          %s2235 = sand.u32 %s108, 1
          %s2236 = scalar_lea.sflag [#allocation4], %s2235
          %s2237 = sand.u32 %s108, 1
          %s2238 = smul.addr %s2237, 256
          %s2239 = scalar_lea.vmem [#allocation3], %s2238
          %2240 = dma.done %s2236, 4096
        $region44: #{tpu_custom_call.1} parent=39 // pred_fallthru
          _
      $region40: #{tpu_custom_call.1} parent=5 // pred_fallthru
        _
    $region6: #{tpu_custom_call.1} parent=1 // loop_footer
      %s16 = sadd.s32 1, %s12
    $region7: #{tpu_custom_call.1} parent=1 // loop_footer_branch
      %11 = sbr.rel target = $region3
    $region8: #{tpu_custom_call.1} parent=1 // loop_exit
      _
    %2241 = vsyncpa [#allocation4], 1
    %s2242 = scalar_lea.sflag [#allocation4], 1
    %2243 = vsyncpa %s2242, 1

</llo_original>
